<compile_context>
chip_gen: v6e
topology: v6e:2x2x1
jax: 0.10.0
libtpu: 0.0.40
codegen_flags: <defaults>
</compile_context>

<pallas_src>
import jax
import jax.numpy as jnp
import numpy as np
from jax import lax
from jax.experimental import pallas as pl
from jax.experimental.pallas import tpu as pltpu


def _self_attention_kernel(x_ref, wqkv_ref, wproj_ref, bias_ref, mask_ref,
                           o_ref):
    """Grid = (B // batch_block,).  One batch tile per step.

    x_ref    : (Bt, N, C) bf16  input tokens for this batch tile
    wqkv_ref : (C, 3C)    bf16  fused qkv weight (pre-transposed, q|k|v blocks)
    wproj_ref: (C, C)     bf16  output projection weight (pre-transposed)
    bias_ref : (1, C)     f32   output projection bias
    mask_ref : (C, C)     f32   0/1 block-diagonal same-head mask
    o_ref    : (Bt, N, C)       output block
    """
    Bt, N, C = x_ref.shape

    # --- Fused QKV projection: one bf16 MXU matmul, f32 accumulate ----------
    x = x_ref[...].reshape(Bt * N, C)                              # bf16
    qkv = jnp.dot(x, wqkv_ref[...],
                  preferred_element_type=jnp.float32)              # (Bt*N, 3C)
    qkv = qkv.reshape(Bt, N, 3 * C)
    q = qkv[..., :C]                                               # (Bt, N, C)
    k = qkv[..., C:2 * C]
    v = qkv[..., 2 * C:]
    # Channel layout is head-major (c = h*D + d), matching the PyTorch
    # reshape(B, N, 3, H, D), so per-head slices are contiguous column blocks.

    # --- L2 normalization over the token axis (== F.normalize(dim=-1) on the
    # (D, N)-transposed tensors), eps matches PyTorch's 1e-12 on the norm.
    # Done in f32; rsqrt lands on the EUP slot.
    q_inv = lax.rsqrt(jnp.maximum(jnp.sum(q * q, axis=1, keepdims=True), 1e-24))
    k_inv = lax.rsqrt(jnp.maximum(jnp.sum(k * k, axis=1, keepdims=True), 1e-24))
    qn = (q * q_inv).astype(jnp.bfloat16)
    kn = (k * k_inv).astype(jnp.bfloat16)

    # --- Channel attention as a block-diagonal (C, C) problem ---------------
    # Full Gram matrix per batch element; the per-head (D, D) attention
    # matrices are exactly its diagonal blocks.
    a = jnp.einsum('bnr,bnc->brc', qn, kn,
                   preferred_element_type=jnp.float32)             # (Bt, C, C)

    # Cosine similarities lie in [-1, 1]: exp cannot overflow, so no row-max
    # subtraction is needed.  Off-block entries are zeroed by the 0/1 mask.
    e = jnp.exp(a) * mask_ref[...]
    denom = jnp.sum(e, axis=-1, keepdims=True)
    attn = (e * pl.reciprocal(denom, approx=True)).astype(jnp.bfloat16)
    # attn_drop / proj_drop are identity (p = 0.0 / eval mode).

    # --- Apply attention: y[b, n, r] = sum_c v[b, n, c] * attn[b, r, c] -----
    # (== per-head attn @ v^T, already permuted back to (N, C) channel layout)
    y = jnp.einsum('bnc,brc->bnr', v.astype(jnp.bfloat16), attn,
                   preferred_element_type=jnp.float32)             # (Bt, N, C)

    # --- Output projection: one (Bt*N, C)@(C, C) bf16 matmul + f32 bias -----
    y = y.reshape(Bt * N, C).astype(jnp.bfloat16)
    out = jnp.dot(y, wproj_ref[...],
                  preferred_element_type=jnp.float32) + bias_ref[...]
    o_ref[...] = out.reshape(Bt, N, C).astype(o_ref.dtype)


def prepare_self_attention_params(w_qkv_pt, w_proj_pt, b_proj, num_head):
    """One-time parameter prep (hoisted off the per-forward hot path).

    PyTorch Linear computes x @ W.T; pre-transpose once, cast the matmul
    weights to bf16, and build the block-diagonal same-head mask once.
    """
    C = w_proj_pt.shape[0]
    D = C // num_head
    w_qkv = jnp.transpose(w_qkv_pt).astype(jnp.bfloat16)      # (C, 3C)
    w_proj_t = jnp.transpose(w_proj_pt).astype(jnp.bfloat16)  # (C, C)
    bias = b_proj.reshape(1, -1).astype(jnp.float32)          # (1, C)
    head = np.arange(C) // D
    same_head = jnp.asarray(
        (head[:, None] == head[None, :]).astype(np.float32))  # (C, C) 0/1
    return w_qkv, w_proj_t, bias, same_head


def _pick_batch_block(B, N):
    """Fold batch elements into one grid step to amortize per-step overhead
    and enlarge the MXU M dimension, but keep >= 2 grid steps (so the v7x
    megacore split across the 'parallel' axis has work) whenever B >= 2."""
    target_rows = 256
    best = 1
    for cand in range(1, B + 1):
        if B % cand:
            continue
        if cand > 1 and cand * N > target_rows:
            break
        if B >= 2 and B // cand < 2:
            break
        best = cand
    return best


def self_attention_pallas(x, w_qkv, w_proj_t, bias, same_head, num_head, *,
                          batch_block=None):
    """x: (B, N, C); w_qkv: (C, 3C) bf16; w_proj_t: (C, C) bf16;
    bias: (1, C) f32; same_head: (C, C) f32 0/1 mask."""
    B, N, C = x.shape
    assert C % num_head == 0
    assert N % 8 == 0, "token count should be sublane-aligned (multiple of 8)"

    if batch_block is None:
        batch_block = _pick_batch_block(B, N)
    assert B % batch_block == 0
    grid_b = B // batch_block
    bt = batch_block

    x_bf16 = x.astype(jnp.bfloat16)

    # --- explicit VMEM budget, sized from the per-step footprint ------------
    f32, bf16 = 4, 2
    consts = C * 3 * C * bf16 + C * C * bf16 + C * f32 + C * C * f32
    io_blocks = 2 * bt * N * C * bf16 + 2 * bt * N * C * f32   # x, out (2-buf)
    live = (bt * N * 3 * C * f32        # qkv
            + 3 * bt * N * C * f32      # q, k, v
            + 2 * bt * N * C * bf16     # qn, kn
            + 3 * bt * C * C * f32      # a, e, attn
            + bt * N * C * f32)         # y
    vmem_bytes = int(1.5 * (consts + io_blocks + live)) + (4 << 20)
    # >= default scoped limit, <= v7x physical (v5e/v6e have 128 MiB headroom).
    vmem_bytes = min(max(vmem_bytes, 32 << 20), 64 << 20)

    def _pallas_fn(single_buffer_consts):
        const_kwargs = (dict(pipeline_mode=pl.Buffered(1))
                        if single_buffer_consts else {})

        def const_spec(shape):
            # Constant index_map: the block stays resident across grid steps.
            return pl.BlockSpec(shape, lambda b: (0,) * len(shape),
                                **const_kwargs)

        return pl.pallas_call(
            _self_attention_kernel,
            out_shape=jax.ShapeDtypeStruct((B, N, C), x.dtype),
            grid_spec=pltpu.PrefetchScalarGridSpec(
                num_scalar_prefetch=0,
                grid=(grid_b,),
                in_specs=[
                    pl.BlockSpec((bt, N, C), lambda b: (b, 0, 0)),  # x
                    const_spec((C, 3 * C)),                         # qkv weight
                    const_spec((C, C)),                             # proj weight
                    const_spec((1, C)),                             # proj bias
                    const_spec((C, C)),                             # head mask
                ],
                out_specs=pl.BlockSpec((bt, N, C), lambda b: (b, 0, 0)),
            ),
            compiler_params=pltpu.CompilerParams(
                dimension_semantics=("parallel",),   # batch axis -> both TCs
                vmem_limit_bytes=vmem_bytes),
        )

    args = (x_bf16, w_qkv, w_proj_t, bias, same_head)
    try:
        return _pallas_fn(True)(*args)
    except Exception:
        # Fallback for Pallas builds without per-BlockSpec pipeline_mode
        # support: identical kernel, default double-buffered constants.
        return _pallas_fn(False)(*args)


def self_attention_reference(x, w_qkv_pt, w_proj_pt, b_proj, num_head):
    """Pure-JAX transliteration of the PyTorch forward (for verification)."""
    B, N, C = x.shape
    D = C // num_head
    qkv = x @ w_qkv_pt.T                                      # (B, N, 3C)
    qkv = qkv.reshape(B, N, 3, num_head, D).transpose(2, 0, 3, 1, 4)
    q, k, v = qkv[0], qkv[1], qkv[2]                           # (B, H, N, D)
    q = jnp.swapaxes(q, -2, -1)                                # (B, H, D, N)
    k = jnp.swapaxes(k, -2, -1)
    v = jnp.swapaxes(v, -2, -1)
    q = q / jnp.maximum(jnp.linalg.norm(q, axis=-1, keepdims=True), 1e-12)
    k = k / jnp.maximum(jnp.linalg.norm(k, axis=-1, keepdims=True), 1e-12)
    attn = q @ jnp.swapaxes(k, -2, -1)                         # (B, H, D, D)
    attn = jax.nn.softmax(attn, axis=-1)
    out = (attn @ v).transpose(0, 3, 1, 2).reshape(B, N, C)
    return out @ w_proj_pt.T + b_proj


if __name__ == "__main__":
    B, N, C, H = 2, 16, 32, 8   # dim=32, num_head=8 -> head_dim=4

    key = jax.random.PRNGKey(0)
    kx, kq, kp, kb = jax.random.split(key, 4)

    x = jax.random.normal(kx, (B, N, C), dtype=jnp.float32)
    # Deterministic synthetic parameters in PyTorch weight layouts.
    bound = 1.0 / np.sqrt(C)
    w_qkv_pt = jax.random.uniform(kq, (3 * C, C), jnp.float32, -bound, bound)
    w_proj_pt = jax.random.uniform(kp, (C, C), jnp.float32, -bound, bound)
    b_proj = jax.random.uniform(kb, (C,), jnp.float32, -bound, bound)

    # One-time parameter prep (not on the per-call hot path).
    w_qkv, w_proj_t, bias, same_head = prepare_self_attention_params(
        w_qkv_pt, w_proj_pt, b_proj, H)

    out = jax.block_until_ready(
        self_attention_pallas(x, w_qkv, w_proj_t, bias, same_head, H))

    ref = jax.block_until_ready(
        self_attention_reference(x, w_qkv_pt, w_proj_pt, b_proj, H))

    # Tolerance accounts for bf16 MXU operands (f32 accumulation) and the EUP
    # approximate reciprocal in the softmax denominator.
    np.testing.assert_allclose(np.asarray(out), np.asarray(ref),
                               rtol=2e-2, atol=2e-2)
    print("KERNEL_OK")
</pallas_src>

<mosaic_0001>
module attributes {stable_mosaic.version = 11 : i64} {
  func.func @_self_attention_kernel(%arg0: i32, %arg1: memref<1x16x32xbf16, #tpu.memory_space<vmem>>, %arg2: memref<32x96xbf16, #tpu.memory_space<vmem>>, %arg3: memref<32x32xbf16, #tpu.memory_space<vmem>>, %arg4: memref<1x32xf32, #tpu.memory_space<vmem>>, %arg5: memref<32x32xf32, #tpu.memory_space<vmem>>, %arg6: memref<1x16x32xf32, #tpu.memory_space<vmem>>) attributes {dimension_semantics = [#tpu.dimension_semantics<parallel>], iteration_bounds = array<i64: 2>, scalar_prefetch = 0 : i64, scratch_operands = 0 : i64, tpu.core_type = #tpu.core_type<tc>, window_params = [{transform_indices = @transform_0, window_bounds = array<i64: 1, 16, 32>}, {pipeline_mode = #tpu.pipeline_mode<synchronous>, transform_indices = @transform_1, window_bounds = array<i64: 32, 96>}, {pipeline_mode = #tpu.pipeline_mode<synchronous>, transform_indices = @transform_2, window_bounds = array<i64: 32, 32>}, {pipeline_mode = #tpu.pipeline_mode<synchronous>, transform_indices = @transform_3, window_bounds = array<i64: 1, 32>}, {pipeline_mode = #tpu.pipeline_mode<synchronous>, transform_indices = @transform_4, window_bounds = array<i64: 32, 32>}, {transform_indices = @transform_5, window_bounds = array<i64: 1, 16, 32>}]} {
    %c0 = arith.constant 0 : index
    %c0_0 = arith.constant 0 : index
    %c0_1 = arith.constant 0 : index
    %0 = vector.load %arg1[%c0, %c0_0, %c0_1] : memref<1x16x32xbf16, #tpu.memory_space<vmem>>, vector<1x16x32xbf16>
    %1 = vector.shape_cast %0 : vector<1x16x32xbf16> to vector<16x32xbf16>
    %c0_2 = arith.constant 0 : index
    %c0_3 = arith.constant 0 : index
    %2 = vector.load %arg2[%c0_2, %c0_3] : memref<32x96xbf16, #tpu.memory_space<vmem>>, vector<32x96xbf16>
    %cst = arith.constant dense<0.000000e+00> : vector<16x96xf32>
    %3 = tpu.matmul %1, %2, %cst {dimension_numbers = #tpu.dot_dimension_numbers<[1], [0], [0], [1], [0, 0, 1, 1], [], []>} : vector<16x32xbf16>, vector<32x96xbf16>, vector<16x96xf32> -> vector<16x96xf32>
    %4 = vector.shape_cast %3 : vector<16x96xf32> to vector<1x16x96xf32>
    %5 = vector.extract_strided_slice %4 {offsets = [0, 0, 0], sizes = [1, 16, 32], strides = [1, 1, 1]} : vector<1x16x96xf32> to vector<1x16x32xf32>
    %6 = vector.extract_strided_slice %4 {offsets = [0, 0, 32], sizes = [1, 16, 32], strides = [1, 1, 1]} : vector<1x16x96xf32> to vector<1x16x32xf32>
    %7 = vector.extract_strided_slice %4 {offsets = [0, 0, 64], sizes = [1, 16, 32], strides = [1, 1, 1]} : vector<1x16x96xf32> to vector<1x16x32xf32>
    %8 = arith.mulf %5, %5 : vector<1x16x32xf32>
    %cst_4 = arith.constant dense<0.000000e+00> : vector<1x32xf32>
    %9 = vector.multi_reduction <add>, %8, %cst_4 [1] : vector<1x16x32xf32> to vector<1x32xf32>
    %10 = vector.shape_cast %9 : vector<1x32xf32> to vector<1x1x32xf32>
    %cst_5 = arith.constant 1.000000e-24 : f32
    %11 = vector.broadcast %cst_5 : f32 to vector<1x1x32xf32>
    %12 = arith.maximumf %10, %11 : vector<1x1x32xf32>
    %13 = math.rsqrt %12 : vector<1x1x32xf32>
    %14 = arith.mulf %6, %6 : vector<1x16x32xf32>
    %cst_6 = arith.constant dense<0.000000e+00> : vector<1x32xf32>
    %15 = vector.multi_reduction <add>, %14, %cst_6 [1] : vector<1x16x32xf32> to vector<1x32xf32>
    %16 = vector.shape_cast %15 : vector<1x32xf32> to vector<1x1x32xf32>
    %cst_7 = arith.constant 1.000000e-24 : f32
    %17 = vector.broadcast %cst_7 : f32 to vector<1x1x32xf32>
    %18 = arith.maximumf %16, %17 : vector<1x1x32xf32>
    %19 = math.rsqrt %18 : vector<1x1x32xf32>
    %20 = vector.broadcast %13 : vector<1x1x32xf32> to vector<1x16x32xf32>
    %21 = arith.mulf %5, %20 : vector<1x16x32xf32>
    %22 = arith.truncf %21 : vector<1x16x32xf32> to vector<1x16x32xbf16>
    %23 = vector.broadcast %19 : vector<1x1x32xf32> to vector<1x16x32xf32>
    %24 = arith.mulf %6, %23 : vector<1x16x32xf32>
    %25 = arith.truncf %24 : vector<1x16x32xf32> to vector<1x16x32xbf16>
    "tpu.trace_start"() <{level = 10 : i32, message = "bnr,bnc->brc"}> : () -> ()
    %cst_8 = arith.constant dense<0.000000e+00> : vector<1x32x32xf32>
    %26 = tpu.matmul %22, %25, %cst_8 {dimension_numbers = #tpu.dot_dimension_numbers<[1], [1], [2], [2], [0, 0, 0, 2, 1, 2], [0], [0]>} : vector<1x16x32xbf16>, vector<1x16x32xbf16>, vector<1x32x32xf32> -> vector<1x32x32xf32>
    "tpu.trace_stop"() : () -> ()
    %27 = math.exp %26 : vector<1x32x32xf32>
    %c0_9 = arith.constant 0 : index
    %c0_10 = arith.constant 0 : index
    %28 = vector.load %arg5[%c0_9, %c0_10] : memref<32x32xf32, #tpu.memory_space<vmem>>, vector<32x32xf32>
    %29 = vector.shape_cast %28 : vector<32x32xf32> to vector<1x32x32xf32>
    %30 = arith.mulf %27, %29 : vector<1x32x32xf32>
    %cst_11 = arith.constant dense<0.000000e+00> : vector<1x32xf32>
    %31 = vector.multi_reduction <add>, %30, %cst_11 [2] : vector<1x32x32xf32> to vector<1x32xf32>
    %32 = vector.shape_cast %31 : vector<1x32xf32> to vector<1x32x1xf32>
    %33 = tpu.reciprocal %32 {approx = true} : vector<1x32x1xf32> -> vector<1x32x1xf32>
    %34 = vector.broadcast %33 : vector<1x32x1xf32> to vector<1x32x32xf32>
    %35 = arith.mulf %30, %34 : vector<1x32x32xf32>
    %36 = arith.truncf %35 : vector<1x32x32xf32> to vector<1x32x32xbf16>
    %37 = arith.truncf %7 : vector<1x16x32xf32> to vector<1x16x32xbf16>
    "tpu.trace_start"() <{level = 10 : i32, message = "bnc,brc->bnr"}> : () -> ()
    %cst_12 = arith.constant dense<0.000000e+00> : vector<1x16x32xf32>
    %38 = tpu.matmul %37, %36, %cst_12 {dimension_numbers = #tpu.dot_dimension_numbers<[2], [2], [1], [1], [0, 0, 0, 1, 1, 1], [0], [0]>} : vector<1x16x32xbf16>, vector<1x32x32xbf16>, vector<1x16x32xf32> -> vector<1x16x32xf32>
    "tpu.trace_stop"() : () -> ()
    %39 = vector.shape_cast %38 : vector<1x16x32xf32> to vector<16x32xf32>
    %40 = arith.truncf %39 : vector<16x32xf32> to vector<16x32xbf16>
    %c0_13 = arith.constant 0 : index
    %c0_14 = arith.constant 0 : index
    %41 = vector.load %arg3[%c0_13, %c0_14] : memref<32x32xbf16, #tpu.memory_space<vmem>>, vector<32x32xbf16>
    %cst_15 = arith.constant dense<0.000000e+00> : vector<16x32xf32>
    %42 = tpu.matmul %40, %41, %cst_15 {dimension_numbers = #tpu.dot_dimension_numbers<[1], [0], [0], [1], [0, 0, 1, 1], [], []>} : vector<16x32xbf16>, vector<32x32xbf16>, vector<16x32xf32> -> vector<16x32xf32>
    %c0_16 = arith.constant 0 : index
    %c0_17 = arith.constant 0 : index
    %43 = vector.load %arg4[%c0_16, %c0_17] : memref<1x32xf32, #tpu.memory_space<vmem>>, vector<1x32xf32>
    %44 = vector.broadcast %43 : vector<1x32xf32> to vector<16x32xf32>
    %45 = arith.addf %42, %44 : vector<16x32xf32>
    %46 = vector.shape_cast %45 : vector<16x32xf32> to vector<1x16x32xf32>
    %c0_18 = arith.constant 0 : index
    %c0_19 = arith.constant 0 : index
    %c0_20 = arith.constant 0 : index
    %47 = vector.load %arg6[%c0_18, %c0_19, %c0_20] : memref<1x16x32xf32, #tpu.memory_space<vmem>>, vector<1x16x32xf32>
    tpu.vector_store %arg6[%c0_18, %c0_19, %c0_20], %46 {strides = array<i32>} : memref<1x16x32xf32, #tpu.memory_space<vmem>>, vector<1x16x32xf32>,
    return
  }
  func.func @transform_0(%arg0: i32) -> (i32, i32, i32) {
    %c0_i32 = arith.constant 0 : i32
    %c0_i32_0 = arith.constant 0 : i32
    %c0_i32_1 = arith.constant 0 : i32
    return %arg0, %c0_i32, %c0_i32_0 : i32, i32, i32
  }
  func.func @transform_1(%arg0: i32) -> (i32, i32) {
    %c0_i32 = arith.constant 0 : i32
    %c0_i32_0 = arith.constant 0 : i32
    %c0_i32_1 = arith.constant 0 : i32
    return %c0_i32, %c0_i32_0 : i32, i32
  }
  func.func @transform_2(%arg0: i32) -> (i32, i32) {
    %c0_i32 = arith.constant 0 : i32
    %c0_i32_0 = arith.constant 0 : i32
    %c0_i32_1 = arith.constant 0 : i32
    return %c0_i32, %c0_i32_0 : i32, i32
  }
  func.func @transform_3(%arg0: i32) -> (i32, i32) {
    %c0_i32 = arith.constant 0 : i32
    %c0_i32_0 = arith.constant 0 : i32
    %c0_i32_1 = arith.constant 0 : i32
    return %c0_i32, %c0_i32_0 : i32, i32
  }
  func.func @transform_4(%arg0: i32) -> (i32, i32) {
    %c0_i32 = arith.constant 0 : i32
    %c0_i32_0 = arith.constant 0 : i32
    %c0_i32_1 = arith.constant 0 : i32
    return %c0_i32, %c0_i32_0 : i32, i32
  }
  func.func @transform_5(%arg0: i32) -> (i32, i32, i32) {
    %c0_i32 = arith.constant 0 : i32
    %c0_i32_0 = arith.constant 0 : i32
    %c0_i32_1 = arith.constant 0 : i32
    return %arg0, %c0_i32, %c0_i32_0 : i32, i32, i32
  }
}

module attributes {stable_mosaic.version = 11 : i64} {
  func.func @_self_attention_kernel(%arg0: i32, %arg1: memref<1x16x32xbf16, #tpu.memory_space<vmem>>, %arg2: memref<32x96xbf16, #tpu.memory_space<vmem>>, %arg3: memref<32x32xbf16, #tpu.memory_space<vmem>>, %arg4: memref<1x32xf32, #tpu.memory_space<vmem>>, %arg5: memref<32x32xf32, #tpu.memory_space<vmem>>, %arg6: memref<1x16x32xf32, #tpu.memory_space<vmem>>) attributes {dimension_semantics = [#tpu.dimension_semantics<parallel>], iteration_bounds = array<i64: 2>, scalar_prefetch = 0 : i64, scratch_operands = 0 : i64, tpu.core_type = #tpu.core_type<tc>, window_params = [{transform_indices = @transform_0, window_bounds = array<i64: 1, 16, 32>}, {pipeline_mode = #tpu.pipeline_mode<synchronous>, transform_indices = @transform_1, window_bounds = array<i64: 32, 96>}, {pipeline_mode = #tpu.pipeline_mode<synchronous>, transform_indices = @transform_2, window_bounds = array<i64: 32, 32>}, {pipeline_mode = #tpu.pipeline_mode<synchronous>, transform_indices = @transform_3, window_bounds = array<i64: 1, 32>}, {pipeline_mode = #tpu.pipeline_mode<synchronous>, transform_indices = @transform_4, window_bounds = array<i64: 32, 32>}, {transform_indices = @transform_5, window_bounds = array<i64: 1, 16, 32>}]} {
    %c0 = arith.constant 0 : index
    %c0_0 = arith.constant 0 : index
    %c0_1 = arith.constant 0 : index
    %0 = vector.load %arg1[%c0, %c0_0, %c0_1] : memref<1x16x32xbf16, #tpu.memory_space<vmem>>, vector<1x16x32xbf16>
    %1 = vector.shape_cast %0 : vector<1x16x32xbf16> to vector<16x32xbf16>
    %c0_2 = arith.constant 0 : index
    %c0_3 = arith.constant 0 : index
    %2 = vector.load %arg2[%c0_2, %c0_3] : memref<32x96xbf16, #tpu.memory_space<vmem>>, vector<32x96xbf16>
    %cst = arith.constant dense<0.000000e+00> : vector<16x96xf32>
    %3 = tpu.matmul %1, %2, %cst {dimension_numbers = #tpu.dot_dimension_numbers<[1], [0], [0], [1], [0, 0, 1, 1], [], []>} : vector<16x32xbf16>, vector<32x96xbf16>, vector<16x96xf32> -> vector<16x96xf32>
    %4 = vector.shape_cast %3 : vector<16x96xf32> to vector<1x16x96xf32>
    %5 = vector.extract_strided_slice %4 {offsets = [0, 0, 0], sizes = [1, 16, 32], strides = [1, 1, 1]} : vector<1x16x96xf32> to vector<1x16x32xf32>
    %6 = vector.extract_strided_slice %4 {offsets = [0, 0, 32], sizes = [1, 16, 32], strides = [1, 1, 1]} : vector<1x16x96xf32> to vector<1x16x32xf32>
    %7 = vector.extract_strided_slice %4 {offsets = [0, 0, 64], sizes = [1, 16, 32], strides = [1, 1, 1]} : vector<1x16x96xf32> to vector<1x16x32xf32>
    %8 = arith.mulf %5, %5 : vector<1x16x32xf32>
    %cst_4 = arith.constant dense<0.000000e+00> : vector<1x32xf32>
    %9 = vector.multi_reduction <add>, %8, %cst_4 [1] : vector<1x16x32xf32> to vector<1x32xf32>
    %10 = vector.shape_cast %9 : vector<1x32xf32> to vector<1x1x32xf32>
    %cst_5 = arith.constant 1.000000e-24 : f32
    %11 = vector.broadcast %cst_5 : f32 to vector<1x1x32xf32>
    %12 = arith.maximumf %10, %11 : vector<1x1x32xf32>
    %13 = math.rsqrt %12 : vector<1x1x32xf32>
    %14 = arith.mulf %6, %6 : vector<1x16x32xf32>
    %cst_6 = arith.constant dense<0.000000e+00> : vector<1x32xf32>
    %15 = vector.multi_reduction <add>, %14, %cst_6 [1] : vector<1x16x32xf32> to vector<1x32xf32>
    %16 = vector.shape_cast %15 : vector<1x32xf32> to vector<1x1x32xf32>
    %cst_7 = arith.constant 1.000000e-24 : f32
    %17 = vector.broadcast %cst_7 : f32 to vector<1x1x32xf32>
    %18 = arith.maximumf %16, %17 : vector<1x1x32xf32>
    %19 = math.rsqrt %18 : vector<1x1x32xf32>
    %20 = vector.broadcast %13 : vector<1x1x32xf32> to vector<1x16x32xf32>
    %21 = arith.mulf %5, %20 : vector<1x16x32xf32>
    %22 = arith.truncf %21 : vector<1x16x32xf32> to vector<1x16x32xbf16>
    %23 = vector.broadcast %19 : vector<1x1x32xf32> to vector<1x16x32xf32>
    %24 = arith.mulf %6, %23 : vector<1x16x32xf32>
    %25 = arith.truncf %24 : vector<1x16x32xf32> to vector<1x16x32xbf16>
    "tpu.trace_start"() <{level = 10 : i32, message = "bnr,bnc->brc"}> : () -> ()
    %cst_8 = arith.constant dense<0.000000e+00> : vector<1x32x32xf32>
    %26 = tpu.matmul %22, %25, %cst_8 {dimension_numbers = #tpu.dot_dimension_numbers<[1], [1], [2], [2], [0, 0, 0, 2, 1, 2], [0], [0]>} : vector<1x16x32xbf16>, vector<1x16x32xbf16>, vector<1x32x32xf32> -> vector<1x32x32xf32>
    "tpu.trace_stop"() : () -> ()
    %27 = math.exp %26 : vector<1x32x32xf32>
    %c0_9 = arith.constant 0 : index
    %c0_10 = arith.constant 0 : index
    %28 = vector.load %arg5[%c0_9, %c0_10] : memref<32x32xf32, #tpu.memory_space<vmem>>, vector<32x32xf32>
    %29 = vector.shape_cast %28 : vector<32x32xf32> to vector<1x32x32xf32>
    %30 = arith.mulf %27, %29 : vector<1x32x32xf32>
    %cst_11 = arith.constant dense<0.000000e+00> : vector<1x32xf32>
    %31 = vector.multi_reduction <add>, %30, %cst_11 [2] : vector<1x32x32xf32> to vector<1x32xf32>
    %32 = vector.shape_cast %31 : vector<1x32xf32> to vector<1x32x1xf32>
    %33 = tpu.reciprocal %32 {approx = true} : vector<1x32x1xf32> -> vector<1x32x1xf32>
    %34 = vector.broadcast %33 : vector<1x32x1xf32> to vector<1x32x32xf32>
    %35 = arith.mulf %30, %34 : vector<1x32x32xf32>
    %36 = arith.truncf %35 : vector<1x32x32xf32> to vector<1x32x32xbf16>
    %37 = arith.truncf %7 : vector<1x16x32xf32> to vector<1x16x32xbf16>
    "tpu.trace_start"() <{level = 10 : i32, message = "bnc,brc->bnr"}> : () -> ()
    %cst_12 = arith.constant dense<0.000000e+00> : vector<1x16x32xf32>
    %38 = tpu.matmul %37, %36, %cst_12 {dimension_numbers = #tpu.dot_dimension_numbers<[2], [2], [1], [1], [0, 0, 0, 1, 1, 1], [0], [0]>} : vector<1x16x32xbf16>, vector<1x32x32xbf16>, vector<1x16x32xf32> -> vector<1x16x32xf32>
    "tpu.trace_stop"() : () -> ()
    %39 = vector.shape_cast %38 : vector<1x16x32xf32> to vector<16x32xf32>
    %40 = arith.truncf %39 : vector<16x32xf32> to vector<16x32xbf16>
    %c0_13 = arith.constant 0 : index
    %c0_14 = arith.constant 0 : index
    %41 = vector.load %arg3[%c0_13, %c0_14] : memref<32x32xbf16, #tpu.memory_space<vmem>>, vector<32x32xbf16>
    %cst_15 = arith.constant dense<0.000000e+00> : vector<16x32xf32>
    %42 = tpu.matmul %40, %41, %cst_15 {dimension_numbers = #tpu.dot_dimension_numbers<[1], [0], [0], [1], [0, 0, 1, 1], [], []>} : vector<16x32xbf16>, vector<32x32xbf16>, vector<16x32xf32> -> vector<16x32xf32>
    %c0_16 = arith.constant 0 : index
    %c0_17 = arith.constant 0 : index
    %43 = vector.load %arg4[%c0_16, %c0_17] : memref<1x32xf32, #tpu.memory_space<vmem>>, vector<1x32xf32>
    %44 = vector.broadcast %43 : vector<1x32xf32> to vector<16x32xf32>
    %45 = arith.addf %42, %44 : vector<16x32xf32>
    %46 = vector.shape_cast %45 : vector<16x32xf32> to vector<1x16x32xf32>
    %c0_18 = arith.constant 0 : index
    %c0_19 = arith.constant 0 : index
    %c0_20 = arith.constant 0 : index
    %47 = vector.load %arg6[%c0_18, %c0_19, %c0_20] : memref<1x16x32xf32, #tpu.memory_space<vmem>>, vector<1x16x32xf32>
    tpu.vector_store %arg6[%c0_18, %c0_19, %c0_20], %46 {strides = array<i32>} : memref<1x16x32xf32, #tpu.memory_space<vmem>>, vector<1x16x32xf32>,
    return
  }
  func.func @transform_0(%arg0: i32) -> (i32, i32, i32) {
    %c0_i32 = arith.constant 0 : i32
    %c0_i32_0 = arith.constant 0 : i32
    %c0_i32_1 = arith.constant 0 : i32
    return %arg0, %c0_i32, %c0_i32_0 : i32, i32, i32
  }
  func.func @transform_1(%arg0: i32) -> (i32, i32) {
    %c0_i32 = arith.constant 0 : i32
    %c0_i32_0 = arith.constant 0 : i32
    %c0_i32_1 = arith.constant 0 : i32
    return %c0_i32, %c0_i32_0 : i32, i32
  }
  func.func @transform_2(%arg0: i32) -> (i32, i32) {
    %c0_i32 = arith.constant 0 : i32
    %c0_i32_0 = arith.constant 0 : i32
    %c0_i32_1 = arith.constant 0 : i32
    return %c0_i32, %c0_i32_0 : i32, i32
  }
  func.func @transform_3(%arg0: i32) -> (i32, i32) {
    %c0_i32 = arith.constant 0 : i32
    %c0_i32_0 = arith.constant 0 : i32
    %c0_i32_1 = arith.constant 0 : i32
    return %c0_i32, %c0_i32_0 : i32, i32
  }
  func.func @transform_4(%arg0: i32) -> (i32, i32) {
    %c0_i32 = arith.constant 0 : i32
    %c0_i32_0 = arith.constant 0 : i32
    %c0_i32_1 = arith.constant 0 : i32
    return %c0_i32, %c0_i32_0 : i32, i32
  }
  func.func @transform_5(%arg0: i32) -> (i32, i32, i32) {
    %c0_i32 = arith.constant 0 : i32
    %c0_i32_0 = arith.constant 0 : i32
    %c0_i32_1 = arith.constant 0 : i32
    return %arg0, %c0_i32, %c0_i32_0 : i32, i32, i32
  }
}

</mosaic_0001>

<llo_original>
// kernel: tpu_custom_call.1
$region0: #{tpu_custom_call.1}
  #allocation0 [shape = 'u32[]', space=smem, size = 0x4, offset = 0x4, fixed_abs, tag = 'smem constant byte address 0x4 - core index']
  #allocation1 [shape = 'u32[144,128]{1,0:T(1,128)}', space=vmem, size = 0x12000, scoped, tag = 'internal scratch']
  %s0 = inlined_call_operand.hbm [shape: bf16[2,16,32], index: 0, kind: input, shape index: {}]
  %s1 = inlined_call_operand.hbm [shape: bf16[32,96], index: 1, kind: input, shape index: {}]
  %s2 = inlined_call_operand.hbm [shape: bf16[32,32], index: 2, kind: input, shape index: {}]
  %s3 = inlined_call_operand.vmem [shape: f32[1,32], index: 3, kind: input, shape index: {}]
  %s4 = inlined_call_operand.hbm [shape: f32[32,32], index: 4, kind: input, shape index: {}]
  %s5 = inlined_call_operand.hbm [shape: f32[2,16,32], index: 5, kind: output, shape index: {}]
  %s6 = sld [smem:[#allocation0]]
  $region69: #{tpu_custom_call.1} parent=0
    _
  %s8 = ssub.s32 1, %s6
  %s9 = scalar_select 0, %s8, %s6
  $region1: #{tpu_custom_call.1} parent=0
    #allocation2 [shape = 'u8[8192]{0}', space=vmem, size = 0x2000, scoped, tag = 'input window, operand 0']
    #allocation3 [shape = 's32[2]{0}', space=sflag, size = 0x8, scoped, tag = 'scoped memory for tpu_custom_call.1']
    #allocation4 [shape = 's32[2]{0}', space=sflag, size = 0x8, scoped, tag = 'scoped memory for tpu_custom_call.1']
    #allocation5 [shape = 'u8[8192]{0}', space=vmem, size = 0x2000, scoped, tag = 'input window, operand 1, single buffered']
    #allocation6 [shape = 's32[1]{0}', space=sflag, size = 0x4, scoped, tag = 'scoped memory for tpu_custom_call.1']
    #allocation7 [shape = 'u8[8192]{0}', space=vmem, size = 0x2000, scoped, tag = 'input window, operand 2, single buffered']
    #allocation8 [shape = 'u8[16384]{0}', space=vmem, size = 0x4000, scoped, tag = 'input window, operand 4, single buffered']
    #allocation9 [shape = 's32[1]{0}', space=sflag, size = 0x4, scoped, tag = 'scoped memory for tpu_custom_call.1']
    #allocation10 [shape = 'u8[16384]{0}', space=vmem, size = 0x4000, scoped, tag = 'output window, operand 0']
    %10 = vsyncpa [#allocation3], 0
    %s11 = scalar_lea.sflag [#allocation3], 1
    %12 = vsyncpa %s11, 0
    %13 = vsyncpa [#allocation6], 0
    %14 = vsyncpa [#allocation9], 0
    %15 = vsyncpa [#allocation4], 0
    %s16 = scalar_lea.sflag [#allocation4], 1
    %17 = vsyncpa %s16, 0
    loop: start=0, step=1, limit=4
    $region2: #{tpu_custom_call.1} parent=1 // loop_pre_header
      _
    $region3: #{tpu_custom_call.1} parent=1 // loop_header
      %s19 = sphi 0, %s23
      %p20 = scmp.ge.s32.totalorder %s19, 4
      %s29 = sphi 0, %s31
      %s32 = sphi 0, %s29
      %s33 = sphi 0, %s32
      %s49 = sphi 0, %s33
      %s53 = sphi 0, %s53
      %s55 = sphi 0, %s53
      %s56 = sphi 0, %s55
      %s70 = sphi 0, %s56
      %s74 = sphi 0, %s74
      %s76 = sphi 0, %s74
      %s77 = sphi 0, %s76
      %s91 = sphi 0, %s77
      %s95 = sphi 0, %s95
      %s97 = sphi 0, %s95
      %s98 = sphi 0, %s97
      %s112 = sphi 0, %s98
      %s116 = sphi 0, %s116
      %s118 = sphi 0, %s116
      %s119 = sphi 0, %s118
      %s133 = sphi 0, %s119
      %s139 = sphi 0, %s141
      %s142 = sphi 0, %s139
      %s143 = sphi 0, %s142
      %s159 = sphi 0, %s143
    $region4: #{tpu_custom_call.1} parent=1 // loop_header_branch
      %22 = sbr.rel (%p20) target = $region8
    $region5: #{tpu_custom_call.1} parent=1 // loop_body
      %s24 = ssub.s32 %s19, 1
      %s25 = ssub.s32 %s19, 2
      %s26 = sadd.s32 %s19, 1
      %s27 = ssub.s32 %s19, %s26
      %p28 = scmp.eq.s32.totalorder %s27, 0
      %s30 = sadd.s32 %s29, 1
      %s31 = scalar_select %p28, %s29, %s30
      %p34 = pneg %p28
      %p35 = scmp.eq.s32.totalorder %s19, 1
      %p36 = por %p34, %p35
      %p37 = scmp.ne.s32.totalorder %s29, %s32
      %p38 = scmp.eq.s32.totalorder %s19, 0
      %p39 = por %p37, %p38
      %p40 = scmp.ne.s32.totalorder %s29, %s32
      %p41 = scmp.eq.s32.totalorder %s24, 1
      %p42 = por %p40, %p41
      %p43 = scmp.ne.s32.totalorder %s32, %s33
      %p44 = scmp.eq.s32.totalorder %s24, 0
      %p45 = por %p43, %p44
      %p46 = scmp.ne.s32.totalorder %s32, %s33
      %p47 = scmp.eq.s32.totalorder %s25, 1
      %p48 = por %p46, %p47
      %p50 = scmp.ne.s32.totalorder %s33, %s49
      %p51 = scmp.eq.s32.totalorder %s25, 0
      %p52 = por %p50, %p51
      %s54 = sadd.s32 %s53, 1
      %p57 = scmp.eq.s32.totalorder %s19, 1
      %p58 = scmp.ne.s32.totalorder %s53, %s55
      %p59 = scmp.eq.s32.totalorder %s19, 0
      %p60 = por %p58, %p59
      %p61 = scmp.ne.s32.totalorder %s53, %s55
      %p62 = scmp.eq.s32.totalorder %s24, 1
      %p63 = por %p61, %p62
      %p64 = scmp.ne.s32.totalorder %s55, %s56
      %p65 = scmp.eq.s32.totalorder %s24, 0
      %p66 = por %p64, %p65
      %p67 = scmp.ne.s32.totalorder %s55, %s56
      %p68 = scmp.eq.s32.totalorder %s25, 1
      %p69 = por %p67, %p68
      %p71 = scmp.ne.s32.totalorder %s56, %s70
      %p72 = scmp.eq.s32.totalorder %s25, 0
      %p73 = por %p71, %p72
      %s75 = sadd.s32 %s74, 1
      %p78 = scmp.eq.s32.totalorder %s19, 1
      %p79 = scmp.ne.s32.totalorder %s74, %s76
      %p80 = scmp.eq.s32.totalorder %s19, 0
      %p81 = por %p79, %p80
      %p82 = scmp.ne.s32.totalorder %s74, %s76
      %p83 = scmp.eq.s32.totalorder %s24, 1
      %p84 = por %p82, %p83
      %p85 = scmp.ne.s32.totalorder %s76, %s77
      %p86 = scmp.eq.s32.totalorder %s24, 0
      %p87 = por %p85, %p86
      %p88 = scmp.ne.s32.totalorder %s76, %s77
      %p89 = scmp.eq.s32.totalorder %s25, 1
      %p90 = por %p88, %p89
      %p92 = scmp.ne.s32.totalorder %s77, %s91
      %p93 = scmp.eq.s32.totalorder %s25, 0
      %p94 = por %p92, %p93
      %s96 = sadd.s32 %s95, 1
      %p99 = scmp.eq.s32.totalorder %s19, 1
      %p100 = scmp.ne.s32.totalorder %s95, %s97
      %p101 = scmp.eq.s32.totalorder %s19, 0
      %p102 = por %p100, %p101
      %p103 = scmp.ne.s32.totalorder %s95, %s97
      %p104 = scmp.eq.s32.totalorder %s24, 1
      %p105 = por %p103, %p104
      %p106 = scmp.ne.s32.totalorder %s97, %s98
      %p107 = scmp.eq.s32.totalorder %s24, 0
      %p108 = por %p106, %p107
      %p109 = scmp.ne.s32.totalorder %s97, %s98
      %p110 = scmp.eq.s32.totalorder %s25, 1
      %p111 = por %p109, %p110
      %p113 = scmp.ne.s32.totalorder %s98, %s112
      %p114 = scmp.eq.s32.totalorder %s25, 0
      %p115 = por %p113, %p114
      %s117 = sadd.s32 %s116, 1
      %p120 = scmp.eq.s32.totalorder %s19, 1
      %p121 = scmp.ne.s32.totalorder %s116, %s118
      %p122 = scmp.eq.s32.totalorder %s19, 0
      %p123 = por %p121, %p122
      %p124 = scmp.ne.s32.totalorder %s116, %s118
      %p125 = scmp.eq.s32.totalorder %s24, 1
      %p126 = por %p124, %p125
      %p127 = scmp.ne.s32.totalorder %s118, %s119
      %p128 = scmp.eq.s32.totalorder %s24, 0
      %p129 = por %p127, %p128
      %p130 = scmp.ne.s32.totalorder %s118, %s119
      %p131 = scmp.eq.s32.totalorder %s25, 1
      %p132 = por %p130, %p131
      %p134 = scmp.ne.s32.totalorder %s119, %s133
      %p135 = scmp.eq.s32.totalorder %s25, 0
      %p136 = por %p134, %p135
      %s137 = ssub.s32 %s19, %s26
      %p138 = scmp.eq.s32.totalorder %s137, 0
      %s140 = sadd.s32 %s139, 1
      %s141 = scalar_select %p138, %s139, %s140
      %p144 = pneg %p138
      %p145 = scmp.eq.s32.totalorder %s19, 1
      %p146 = por %p144, %p145
      %p147 = scmp.ne.s32.totalorder %s139, %s142
      %p148 = scmp.eq.s32.totalorder %s19, 0
      %p149 = por %p147, %p148
      %p150 = scmp.ne.s32.totalorder %s139, %s142
      %p151 = scmp.eq.s32.totalorder %s24, 1
      %p152 = por %p150, %p151
      %p153 = scmp.ne.s32.totalorder %s142, %s143
      %p154 = scmp.eq.s32.totalorder %s24, 0
      %p155 = por %p153, %p154
      %p156 = scmp.ne.s32.totalorder %s142, %s143
      %p157 = scmp.eq.s32.totalorder %s25, 1
      %p158 = por %p156, %p157
      %p160 = scmp.ne.s32.totalorder %s143, %s159
      %p161 = scmp.eq.s32.totalorder %s25, 0
      %p162 = por %p160, %p161
      %p163 = scmp.le.s32.totalorder 1, %s19
      %p164 = scmp.lt.s32.totalorder %s19, 3
      %p165 = pnand %p163, %p164
      %p166 = pneg %p165
      // Predicated region
      $region9: #{tpu_custom_call.1} parent=5 // pred_check
        _
      $region10: #{tpu_custom_call.1} parent=5 // pred_check_branch
        %168 = sbr.rel (%p165) target = $region12
      $region11: #{tpu_custom_call.1} parent=5 // pred_region
        %s169 = ssub.s32 %s19, 1
        // Predicated region
        $region13: #{tpu_custom_call.1} parent=11 // pred_check
          %p170 = pneg %p66
        $region14: #{tpu_custom_call.1} parent=11 // pred_check_branch
          %172 = sbr.rel (%p170) target = $region16
        $region15: #{tpu_custom_call.1} parent=11 // pred_region
          %s174 = ssub.s32 256, 256
          %175 = vsyncadd [#allocation6], %s174
          %s176 = sshll.u32 [#allocation5], 4
          %s177 = int_to_ptr.vmem [resolvable:$true] %s176
          %182 = dma.hbm_to_vmem [thread:$0]  %s1, 256, %s177, [#allocation6], 64, 64, 4
        $region16: #{tpu_custom_call.1} parent=11 // pred_fallthru
          _
        // Predicated region
        $region17: #{tpu_custom_call.1} parent=11 // pred_check
          %p183 = pneg %p87
        $region18: #{tpu_custom_call.1} parent=11 // pred_check_branch
          %185 = sbr.rel (%p183) target = $region20
        $region19: #{tpu_custom_call.1} parent=11 // pred_region
          %s187 = ssub.s32 256, 256
          %188 = vsyncadd [#allocation6], %s187
          %s189 = sshll.u32 [#allocation7], 4
          %s190 = int_to_ptr.vmem [resolvable:$true] %s189
          %195 = dma.hbm_to_vmem [thread:$0]  %s2, 256, %s190, [#allocation6], 64, 64, 4
        $region20: #{tpu_custom_call.1} parent=11 // pred_fallthru
          _
        // Predicated region
        $region21: #{tpu_custom_call.1} parent=11 // pred_check
          %p196 = pneg %p108
        $region22: #{tpu_custom_call.1} parent=11 // pred_check_branch
          %198 = sbr.rel (%p196) target = $region24
        $region23: #{tpu_custom_call.1} parent=11 // pred_region
          _
        $region24: #{tpu_custom_call.1} parent=11 // pred_fallthru
          _
        // Predicated region
        $region25: #{tpu_custom_call.1} parent=11 // pred_check
          %p199 = pneg %p129
        $region26: #{tpu_custom_call.1} parent=11 // pred_check_branch
          %201 = sbr.rel (%p199) target = $region28
        $region27: #{tpu_custom_call.1} parent=11 // pred_region
          %s203 = ssub.s32 512, 512
          %204 = vsyncadd [#allocation9], %s203
          %s205 = sshll.u32 [#allocation8], 4
          %s206 = int_to_ptr.vmem [resolvable:$true] %s205
          %211 = dma.hbm_to_vmem [thread:$0]  %s4, 512, %s206, [#allocation9], 128, 128, 8
        $region28: #{tpu_custom_call.1} parent=11 // pred_fallthru
          _
      $region12: #{tpu_custom_call.1} parent=5 // pred_fallthru
        _
      %p212 = scmp.lt.s32.totalorder %s19, 2
      // Predicated region
      $region29: #{tpu_custom_call.1} parent=5 // pred_check
        %p213 = pneg %p212
      $region30: #{tpu_custom_call.1} parent=5 // pred_check_branch
        %215 = sbr.rel (%p213) target = $region32
      $region31: #{tpu_custom_call.1} parent=5 // pred_region
        // Predicated region
        $region33: #{tpu_custom_call.1} parent=31 // pred_check
          %p216 = pneg %p39
        $region34: #{tpu_custom_call.1} parent=31 // pred_check_branch
          %218 = sbr.rel (%p216) target = $region36
        $region35: #{tpu_custom_call.1} parent=31 // pred_region
          %s219 = sand.u32 %s29, 1
          %s220 = scalar_lea.sflag [#allocation3], %s219
          %s221 = sand.u32 %s29, 1
          %s222 = smul.addr %s221, 8
          %s223 = scalar_lea.vmem [#allocation2], %s222
          %s225 = ssub.s32 128, 128
          %226 = vsyncadd %s220, %s225
          %s227 = smul.addr %s19, 2
          %s228 = smul.addr %s227, 64
          %s229 = scalar_lea.hbm %s0, %s228
          %s230 = sshll.u32 %s223, 4
          %s231 = int_to_ptr.vmem [resolvable:$true] %s230
          %236 = dma.hbm_to_vmem [thread:$0]  %s229, 128, %s231, %s220, 64, 64, 4
        $region36: #{tpu_custom_call.1} parent=31 // pred_fallthru
          _
      $region32: #{tpu_custom_call.1} parent=5 // pred_fallthru
        _
      %p237 = scmp.le.s32.totalorder 1, %s19
      %p238 = scmp.lt.s32.totalorder %s19, 3
      %p239 = pnand %p237, %p238
      %p240 = pneg %p239
      // Predicated region
      $region37: #{tpu_custom_call.1} parent=5 // pred_check
        _
      $region38: #{tpu_custom_call.1} parent=5 // pred_check_branch
        %242 = sbr.rel (%p239) target = $region40
      $region39: #{tpu_custom_call.1} parent=5 // pred_region
        %s243 = ssub.s32 %s19, 1
        %s244 = sand.u32 %s32, 1
        %s245 = scalar_lea.sflag [#allocation3], %s244
        %s246 = sand.u32 %s32, 1
        %s247 = smul.addr %s246, 8
        %s248 = scalar_lea.vmem [#allocation2], %s247
        // Predicated region
        $region41: #{tpu_custom_call.1} parent=39 // pred_check
          %p249 = pneg %p45
        $region42: #{tpu_custom_call.1} parent=39 // pred_check_branch
          %251 = sbr.rel (%p249) target = $region44
        $region43: #{tpu_custom_call.1} parent=39 // pred_region
          %252 = dma.done %s245, 128
        $region44: #{tpu_custom_call.1} parent=39 // pred_fallthru
          _
        // Predicated region
        $region45: #{tpu_custom_call.1} parent=39 // pred_check
          %p253 = pneg %p66
        $region46: #{tpu_custom_call.1} parent=39 // pred_check_branch
          %255 = sbr.rel (%p253) target = $region48
        $region47: #{tpu_custom_call.1} parent=39 // pred_region
          %256 = dma.done [#allocation6], 256
        $region48: #{tpu_custom_call.1} parent=39 // pred_fallthru
          _
        // Predicated region
        $region49: #{tpu_custom_call.1} parent=39 // pred_check
          %p257 = pneg %p87
        $region50: #{tpu_custom_call.1} parent=39 // pred_check_branch
          %259 = sbr.rel (%p257) target = $region52
        $region51: #{tpu_custom_call.1} parent=39 // pred_region
          %260 = dma.done [#allocation6], 256
        $region52: #{tpu_custom_call.1} parent=39 // pred_fallthru
          _
        // Predicated region
        $region53: #{tpu_custom_call.1} parent=39 // pred_check
          %p261 = pneg %p129
        $region54: #{tpu_custom_call.1} parent=39 // pred_check_branch
          %263 = sbr.rel (%p261) target = $region56
        $region55: #{tpu_custom_call.1} parent=39 // pred_region
          %264 = dma.done [#allocation9], 512
        $region56: #{tpu_custom_call.1} parent=39 // pred_fallthru
          _
        %s265 = sand.u32 %s32, 1
        %s266 = scalar_lea.sflag [#allocation3], %s265
        %s267 = sand.u32 %s32, 1
        %s268 = smul.addr %s267, 8
        %s269 = scalar_lea.vmem [#allocation2], %s268
        %p270 = pneg %p45
        %p271 = pneg %p42
        %p272 = pneg %p66
        %p273 = pneg %p63
        %p274 = pneg %p87
        %p275 = pneg %p84
        %p276 = pneg %p108
        %p277 = pneg %p105
        %p278 = pneg %p129
        %p279 = pneg %p126
        %p280 = pneg %p155
        %p281 = pneg %p152
        %s282 = sand.u32 %s142, 1
        %s283 = scalar_lea.sflag [#allocation4], %s282
        %s284 = sand.u32 %s142, 1
        %s285 = smul.addr %s284, 16
        %s286 = scalar_lea.vmem [#allocation10], %s285
        %v288 = vld [vmem:[%s248] sm:$0xf]
        %v289 = vld [vmem:[%s248 + $0x4] sm:$0xf]
        %v290 = vld [vmem:[#allocation5] sm:$0xf]
        %v291 = vld [vmem:[#allocation5 + $0x4] sm:$0xf]
        %v292 = vld [vmem:[#allocation5 + $0x8] sm:$0xf]
        %v293 = vld [vmem:[#allocation5 + $0xc] sm:$0xf]
        %v296 = vunpack.c.l.b16 %v288
        %v297 = vunpack.c.l.b16 %v289
        %v298 = vpack.c.b16 %v297, %v296
        %v303 = vunpack.c.l.b16 %v290
        %v304 = vunpack.c.l.b16 %v291
        %v305 = vunpack.c.l.b16 %v292
        %v306 = vunpack.c.l.b16 %v293
        %v307 = vpack.c.b16 %v304, %v303
        %v308 = vpack.c.b16 %v306, %v305
        %vm311 = vcmask 261120
        %v313 = vsel %vm311, %v298, 0
        %315 = vmatprep.subr.bf16.mxu0 0
        %316 = vmatpush1.bf16.msra.mxu0 0
        %317 = vmatprep.subr.bf16.mxu0 0
        %318 = vmatpush1.bf16.msra.mxu0 0
        %319 = vmatprep.subr.bf16.mxu0 0
        %320 = vmatpush1.bf16.msra.mxu0 0
        %321 = vmatprep.subr.bf16.mxu0 0
        %322 = vmatpush1.bf16.msra.mxu0 0
        %323 = vmatprep.subr.bf16.mxu0 0
        %324 = vmatpush1.bf16.msra.mxu0 0
        %325 = vmatprep.subr.bf16.mxu0 0
        %326 = vmatpush1.bf16.msra.mxu0 0
        %327 = vmatprep.subr.bf16.mxu0 0
        %328 = vmatpush1.bf16.msra.mxu0 %v308
        %329 = vmatprep.subr.bf16.mxu0 0
        %330 = vmatpush1.bf16.msra.mxu0 %v307
        %331 = vmatprep.subr.bf16.mxu0 0
        %332 = vmatpush2.bf16.msra.mxu0 0
        %333 = vmatprep.subr.bf16.mxu0 0
        %334 = vmatpush2.bf16.msra.mxu0 0
        %335 = vmatprep.subr.bf16.mxu0 0
        %336 = vmatpush2.bf16.msra.mxu0 0
        %337 = vmatprep.subr.bf16.mxu0 0
        %338 = vmatpush2.bf16.msra.mxu0 0
        %339 = vmatprep.subr.bf16.mxu0 0
        %340 = vmatpush2.bf16.msra.mxu0 0
        %341 = vmatprep.subr.bf16.mxu0 0
        %342 = vmatpush2.bf16.msra.mxu0 0
        %343 = vmatprep.subr.bf16.mxu0 0
        %344 = vmatpush2.bf16.msra.mxu0 0
        %345 = vmatprep.subr.bf16.mxu0 0
        %346 = vmatpush2.bf16.msra.mxu0 0
        %347 = vmatprep.mubr.bf16.mxu0 0
        %348 = vmatmul.mubr.bf16.gmra.mxu0 %v313
        %v349 = vpop.f32.mrf.mxu0
        %v350 = vadd.f32 0.0, %v349
        %v351 = vpop.f32.mrf.mxu0
        %v352 = vpop.f32.mrf.mxu0
        %v353 = vadd.f32 0.0, %v352
        %v354 = vpop.f32.mrf.mxu0
        %355 = vdwg.mxu0
        %v356 = vmul.f32 %v350, %v350
        %v357 = vmul.f32 %v353, %v353
        %v358 = vsel %vm311, %v356, 0.0
        %v359 = vsel %vm311, %v357, 0.0
        %v360 = vadd.f32 %v358, %v359
        %v361 = vrot.slane %v360, 4
        %v362 = vadd.f32 %v360, %v361
        %v363 = vrot.slane %v362, 2
        %v364 = vadd.f32 %v362, %v363
        %v365 = vrot.slane %v364, 1
        %v366 = vadd.f32 %v364, %v365
        %v367 = vmax.f32 %v366, 1e-24
        %v368 = vrsqrt.pop %v367
        %vm369 = vcmask 523520
        %v370 = vsel %vm369, %v356, 0.0
        %v371 = vsel %vm369, %v357, 0.0
        %v372 = vadd.f32 %v370, %v371
        %v373 = vrot.slane %v372, 4
        %v374 = vadd.f32 %v372, %v373
        %v375 = vrot.slane %v374, 2
        %v376 = vadd.f32 %v374, %v375
        %v377 = vrot.slane %v376, 1
        %v378 = vadd.f32 %v376, %v377
        %v379 = vmax.f32 %v378, 1e-24
        %v380 = vrsqrt.pop %v379
        %v381 = vmul.f32 %v350, %v368
        %v382 = vmul.f32 %v353, %v368
        %v383 = vpack.c.bf16 %v382, %v381
        %v384 = vmul.f32 %v350, %v380
        %v385 = vmul.f32 %v353, %v380
        %v386 = vpack.c.bf16 %v385, %v384
        %387 = vxpose.xlu0.c.b16.start [1/8] %v383, 128
        %388 = vxpose.xlu0.c.b16.cont [2/8] 0, 128
        %389 = vxpose.xlu0.c.b16.cont [3/8] 0, 128
        %390 = vxpose.xlu0.c.b16.cont [4/8] 0, 128
        %391 = vxpose.xlu0.c.b16.cont [5/8] 0, 128
        %392 = vxpose.xlu0.c.b16.cont [6/8] 0, 128
        %393 = vxpose.xlu0.c.b16.cont [7/8] 0, 128
        %394 = vxpose.xlu0.c.b16.end [8/8] 0, 128
        %v395 = vpop.trf.xlu0
        %v396 = vpop.trf.xlu0
        %v397 = vpop.trf.xlu0
        %v398 = vpop.trf.xlu0
        %v399 = vpop.trf.xlu0
        %v400 = vpop.trf.xlu0
        %v401 = vpop.trf.xlu0
        %v402 = vpop.trf.xlu0
        %404 = vrot.lane.b32.xlu0 %v386, 96
        %v405 = vpop.permute.xlu0 %404
        %vm407 = vcmask 130048
        %v409 = vsel %vm407, %v395, 0
        %v412 = vsel %vm407, %v396, 0
        %414 = vmatprep.subr.bf16.mxu0 0
        %415 = vmatpush1.bf16.msra.mxu0 0
        %416 = vmatprep.subr.bf16.mxu0 0
        %417 = vmatpush1.bf16.msra.mxu0 0
        %418 = vmatprep.subr.bf16.mxu0 0
        %419 = vmatpush1.bf16.msra.mxu0 0
        %420 = vmatprep.subr.bf16.mxu0 0
        %421 = vmatpush1.bf16.msra.mxu0 0
        %422 = vmatprep.subr.bf16.mxu0 0
        %423 = vmatpush1.bf16.msra.mxu0 0
        %424 = vmatprep.subr.bf16.mxu0 0
        %425 = vmatpush1.bf16.msra.mxu0 0
        %426 = vmatprep.subr.bf16.mxu0 0
        %427 = vmatpush1.bf16.msra.mxu0 0
        %428 = vmatprep.subr.bf16.mxu0 0
        %429 = vmatpush1.bf16.msra.mxu0 %v405
        %430 = vmatprep.subr.bf16.mxu0 0
        %431 = vmatpush2.bf16.msra.mxu0 0
        %432 = vmatprep.subr.bf16.mxu0 0
        %433 = vmatpush2.bf16.msra.mxu0 0
        %434 = vmatprep.subr.bf16.mxu0 0
        %435 = vmatpush2.bf16.msra.mxu0 0
        %436 = vmatprep.subr.bf16.mxu0 0
        %437 = vmatpush2.bf16.msra.mxu0 0
        %438 = vmatprep.subr.bf16.mxu0 0
        %439 = vmatpush2.bf16.msra.mxu0 0
        %440 = vmatprep.subr.bf16.mxu0 0
        %441 = vmatpush2.bf16.msra.mxu0 0
        %442 = vmatprep.subr.bf16.mxu0 0
        %443 = vmatpush2.bf16.msra.mxu0 0
        %444 = vmatprep.subr.bf16.mxu0 0
        %445 = vmatpush2.bf16.msra.mxu0 0
        %446 = vmatprep.mubr.bf16.mxu0 0
        %447 = vmatmul.mubr.bf16.gmra.mxu0 %v409
        %v448 = vpop.f32.mrf.mxu0
        %v449 = vadd.f32 0.0, %v448
        %v450 = vpop.f32.mrf.mxu0
        %v451 = vpop.f32.mrf.mxu0
        %v452 = vadd.f32 0.0, %v451
        %v453 = vpop.f32.mrf.mxu0
        %454 = vmatprep.mubr.bf16.mxu0 0
        %455 = vmatmul.mubr.bf16.gmra.mxu0 %v412
        %v456 = vpop.f32.mrf.mxu0
        %v457 = vadd.f32 0.0, %v456
        %v458 = vpop.f32.mrf.mxu0
        %v459 = vpop.f32.mrf.mxu0
        %v460 = vadd.f32 0.0, %v459
        %v461 = vpop.f32.mrf.mxu0
        %462 = vdwg.mxu0
        %v463 = vmul.f32 %v449, 1.442695
        %v464 = vpow.pop %v463
        %v465 = vmul.f32 %v452, 1.442695
        %v466 = vpow.pop %v465
        %v467 = vmul.f32 %v457, 1.442695
        %v468 = vpow.pop %v467
        %v469 = vmul.f32 %v460, 1.442695
        %v470 = vpow.pop %v469
        %v471 = vld [vmem:[#allocation8] sm:$0xff]
        %v472 = vld [vmem:[#allocation8 + $0x8] sm:$0xff]
        %v473 = vld [vmem:[#allocation8 + $0x10] sm:$0xff]
        %v474 = vld [vmem:[#allocation8 + $0x18] sm:$0xff]
        %v475 = vmul.f32 %v464, %v471
        %v476 = vmul.f32 %v466, %v472
        %v477 = vmul.f32 %v468, %v473
        %v478 = vmul.f32 %v470, %v474
        %v479 = vsel %vm311, %v475, 0.0
        %480 = vadd.xlane.f32.xlu0 %v479
        %v481 = vpop.xlane.xlu0 %480
        %v482 = vsel %vm311, %v476, 0.0
        %483 = vadd.xlane.f32.xlu0 %v482
        %v484 = vpop.xlane.xlu0 %483
        %v485 = vsel %vm311, %v477, 0.0
        %486 = vadd.xlane.f32.xlu0 %v485
        %v487 = vpop.xlane.xlu0 %486
        %v488 = vsel %vm311, %v478, 0.0
        %489 = vadd.xlane.f32.xlu0 %v488
        %v490 = vpop.xlane.xlu0 %489
        %v491 = vrcp.pop %v481
        %v492 = vrcp.pop %v484
        %v493 = vrcp.pop %v487
        %v494 = vrcp.pop %v490
        %v495 = vmul.f32 %v475, %v491
        %v496 = vmul.f32 %v476, %v492
        %v497 = vmul.f32 %v477, %v493
        %v498 = vmul.f32 %v478, %v494
        %v499 = vpack.c.bf16 %v496, %v495
        %v500 = vpack.c.bf16 %v498, %v497
        %v501 = vpack.c.bf16 %v353, %v350
        %503 = vrot.lane.b32.xlu0 %v501, 64
        %v504 = vpop.permute.xlu0 %503
        %v506 = vsel %vm311, %v504, 0
        %v509 = vsel %vm311, %v499, 0
        %v512 = vsel %vm311, %v500, 0
        %514 = vmatprep.subr.bf16.mxu0 0
        %515 = vmatpush1.bf16.xpose.msra.mxu0 0
        %516 = vmatprep.subr.bf16.mxu0 0
        %517 = vmatpush1.bf16.xpose.msra.mxu0 0
        %518 = vmatprep.subr.bf16.mxu0 0
        %519 = vmatpush1.bf16.xpose.msra.mxu0 0
        %520 = vmatprep.subr.bf16.mxu0 0
        %521 = vmatpush1.bf16.xpose.msra.mxu0 0
        %522 = vmatprep.subr.bf16.mxu0 0
        %523 = vmatpush1.bf16.xpose.msra.mxu0 0
        %524 = vmatprep.subr.bf16.mxu0 0
        %525 = vmatpush1.bf16.xpose.msra.mxu0 0
        %526 = vmatprep.subr.bf16.mxu0 0
        %527 = vmatpush1.bf16.xpose.msra.mxu0 %v512
        %528 = vmatprep.subr.bf16.mxu0 0
        %529 = vmatpush1.bf16.xpose.msra.mxu0 %v509
        %530 = vmatprep.subr.bf16.mxu0 0
        %531 = vmatpush2.bf16.xpose.msra.mxu0 0
        %532 = vmatprep.subr.bf16.mxu0 0
        %533 = vmatpush2.bf16.xpose.msra.mxu0 0
        %534 = vmatprep.subr.bf16.mxu0 0
        %535 = vmatpush2.bf16.xpose.msra.mxu0 0
        %536 = vmatprep.subr.bf16.mxu0 0
        %537 = vmatpush2.bf16.xpose.msra.mxu0 0
        %538 = vmatprep.subr.bf16.mxu0 0
        %539 = vmatpush2.bf16.xpose.msra.mxu0 0
        %540 = vmatprep.subr.bf16.mxu0 0
        %541 = vmatpush2.bf16.xpose.msra.mxu0 0
        %542 = vmatprep.subr.bf16.mxu0 0
        %543 = vmatpush2.bf16.xpose.msra.mxu0 0
        %544 = vmatprep.subr.bf16.mxu0 0
        %545 = vmatpush2.bf16.xpose.msra.mxu0 0
        %546 = vmatprep.mubr.bf16.mxu0 0
        %547 = vmatmul.mubr.bf16.gmra.mxu0 %v506
        %v548 = vpop.f32.mrf.mxu0
        %v549 = vadd.f32 0.0, %v548
        %v550 = vpop.f32.mrf.mxu0
        %v551 = vpop.f32.mrf.mxu0
        %v552 = vadd.f32 0.0, %v551
        %v553 = vpop.f32.mrf.mxu0
        %554 = vdwg.mxu0
        %v555 = vpack.c.bf16 %v552, %v549
        %v556 = vld [vmem:[#allocation7] sm:$0xf]
        %v557 = vld [vmem:[#allocation7 + $0x4] sm:$0xf]
        %v558 = vld [vmem:[#allocation7 + $0x8] sm:$0xf]
        %v559 = vld [vmem:[#allocation7 + $0xc] sm:$0xf]
        %v560 = vld [vmem:[%s3] sm:$0x1]
        %v562 = vlaneseq
        %v563 = vshrl.u32 %v562, 7
        %v564 = vsub.s32 0, %v563
        %v565 = vrot.slane %v560, %v564
        %v571 = vunpack.c.l.b16 %v556
        %v572 = vunpack.c.l.b16 %v557
        %v573 = vunpack.c.l.b16 %v558
        %v574 = vunpack.c.l.b16 %v559
        %v575 = vpack.c.b16 %v572, %v571
        %v576 = vpack.c.b16 %v574, %v573
        %v580 = vsel %vm311, %v555, 0
        %582 = vmatprep.subr.bf16.mxu0 0
        %583 = vmatpush1.bf16.msra.mxu0 0
        %584 = vmatprep.subr.bf16.mxu0 0
        %585 = vmatpush1.bf16.msra.mxu0 0
        %586 = vmatprep.subr.bf16.mxu0 0
        %587 = vmatpush1.bf16.msra.mxu0 0
        %588 = vmatprep.subr.bf16.mxu0 0
        %589 = vmatpush1.bf16.msra.mxu0 0
        %590 = vmatprep.subr.bf16.mxu0 0
        %591 = vmatpush1.bf16.msra.mxu0 0
        %592 = vmatprep.subr.bf16.mxu0 0
        %593 = vmatpush1.bf16.msra.mxu0 0
        %594 = vmatprep.subr.bf16.mxu0 0
        %595 = vmatpush1.bf16.msra.mxu0 %v576
        %596 = vmatprep.subr.bf16.mxu0 0
        %597 = vmatpush1.bf16.msra.mxu0 %v575
        %598 = vmatprep.subr.bf16.mxu0 0
        %599 = vmatpush2.bf16.msra.mxu0 0
        %600 = vmatprep.subr.bf16.mxu0 0
        %601 = vmatpush2.bf16.msra.mxu0 0
        %602 = vmatprep.subr.bf16.mxu0 0
        %603 = vmatpush2.bf16.msra.mxu0 0
        %604 = vmatprep.subr.bf16.mxu0 0
        %605 = vmatpush2.bf16.msra.mxu0 0
        %606 = vmatprep.subr.bf16.mxu0 0
        %607 = vmatpush2.bf16.msra.mxu0 0
        %608 = vmatprep.subr.bf16.mxu0 0
        %609 = vmatpush2.bf16.msra.mxu0 0
        %610 = vmatprep.subr.bf16.mxu0 0
        %611 = vmatpush2.bf16.msra.mxu0 0
        %612 = vmatprep.subr.bf16.mxu0 0
        %613 = vmatpush2.bf16.msra.mxu0 0
        %614 = vmatprep.mubr.bf16.mxu0 0
        %615 = vmatmul.mubr.bf16.gmra.mxu0 %v580
        %v616 = vpop.f32.mrf.mxu0
        %v617 = vadd.f32 %v565, %v616
        %v618 = vpop.f32.mrf.mxu0
        %v619 = vpop.f32.mrf.mxu0
        %v620 = vadd.f32 %v565, %v619
        %v621 = vpop.f32.mrf.mxu0
        %622 = vdwg.mxu0
        %623 = vst.msk [vmem:[%s286] sm:$0xff] %vm311, %v617
        %624 = vst.msk [vmem:[%s286 + $0x8] sm:$0xff] %vm311, %v620
        %s625 = sand.u32 %s142, 1
        %s626 = scalar_lea.sflag [#allocation4], %s625
        %s627 = sand.u32 %s142, 1
        %s628 = smul.addr %s627, 16
        %s629 = scalar_lea.vmem [#allocation10], %s628
        // Predicated region
        $region57: #{tpu_custom_call.1} parent=39 // pred_check
          %p630 = pneg %p152
        $region58: #{tpu_custom_call.1} parent=39 // pred_check_branch
          %632 = sbr.rel (%p630) target = $region60
        $region59: #{tpu_custom_call.1} parent=39 // pred_region
          %s634 = ssub.s32 256, 256
          %635 = vsyncadd %s626, %s634
          %s636 = smul.addr %s24, 2
          %s637 = smul.addr %s636, 128
          %s638 = scalar_lea.hbm %s5, %s637
          %s639 = sshll.u32 %s629, 4
          %s640 = int_to_ptr.vmem [resolvable:$true] %s639
          %645 = dma.vmem_to_hbm [thread:$0]  %s640, 256, %s638, %s626, 128, 128, 8
        $region60: #{tpu_custom_call.1} parent=39 // pred_fallthru
          _
      $region40: #{tpu_custom_call.1} parent=5 // pred_fallthru
        _
      %p646 = scmp.le.s32.totalorder 2, %s19
      // Predicated region
      $region61: #{tpu_custom_call.1} parent=5 // pred_check
        %p647 = pneg %p646
      $region62: #{tpu_custom_call.1} parent=5 // pred_check_branch
        %649 = sbr.rel (%p647) target = $region64
      $region63: #{tpu_custom_call.1} parent=5 // pred_region
        %s650 = ssub.s32 %s19, 2
        // Predicated region
        $region65: #{tpu_custom_call.1} parent=63 // pred_check
          %p651 = pneg %p158
        $region66: #{tpu_custom_call.1} parent=63 // pred_check_branch
          %653 = sbr.rel (%p651) target = $region68
        $region67: #{tpu_custom_call.1} parent=63 // pred_region
          %s654 = sand.u32 %s143, 1
          %s655 = scalar_lea.sflag [#allocation4], %s654
          %s656 = sand.u32 %s143, 1
          %s657 = smul.addr %s656, 16
          %s658 = scalar_lea.vmem [#allocation10], %s657
          %659 = dma.done %s655, 256
        $region68: #{tpu_custom_call.1} parent=63 // pred_fallthru
          _
      $region64: #{tpu_custom_call.1} parent=5 // pred_fallthru
        _
    $region6: #{tpu_custom_call.1} parent=1 // loop_footer
      %s23 = sadd.s32 1, %s19
    $region7: #{tpu_custom_call.1} parent=1 // loop_footer_branch
      %18 = sbr.rel target = $region3
    $region8: #{tpu_custom_call.1} parent=1 // loop_exit
      _
    %660 = vsyncpa [#allocation3], 1
    %s661 = scalar_lea.sflag [#allocation3], 1
    %662 = vsyncpa %s661, 1
    %663 = vsyncpa [#allocation6], 1
    %664 = vsyncpa [#allocation9], 1
    %665 = vsyncpa [#allocation4], 1
    %s666 = scalar_lea.sflag [#allocation4], 1
    %667 = vsyncpa %s666, 1

// kernel: tpu_custom_call.1
$region0: #{tpu_custom_call.1}
  #allocation0 [shape = 'u32[]', space=smem, size = 0x4, offset = 0x4, fixed_abs, tag = 'smem constant byte address 0x4 - core index']
  #allocation1 [shape = 'u32[144,128]{1,0:T(1,128)}', space=vmem, size = 0x12000, scoped, tag = 'internal scratch']
  %s0 = inlined_call_operand.hbm [shape: bf16[2,16,32], index: 0, kind: input, shape index: {}]
  %s1 = inlined_call_operand.hbm [shape: bf16[32,96], index: 1, kind: input, shape index: {}]
  %s2 = inlined_call_operand.hbm [shape: bf16[32,32], index: 2, kind: input, shape index: {}]
  %s3 = inlined_call_operand.vmem [shape: f32[1,32], index: 3, kind: input, shape index: {}]
  %s4 = inlined_call_operand.hbm [shape: f32[32,32], index: 4, kind: input, shape index: {}]
  %s5 = inlined_call_operand.hbm [shape: f32[2,16,32], index: 5, kind: output, shape index: {}]
  %s6 = sld [smem:[#allocation0]]
  $region69: #{tpu_custom_call.1} parent=0
    _
  %s8 = ssub.s32 1, %s6
  %s9 = scalar_select 0, %s8, %s6
  $region1: #{tpu_custom_call.1} parent=0
    #allocation2 [shape = 'u8[8192]{0}', space=vmem, size = 0x2000, scoped, tag = 'input window, operand 0']
    #allocation3 [shape = 's32[2]{0}', space=sflag, size = 0x8, scoped, tag = 'scoped memory for tpu_custom_call.1']
    #allocation4 [shape = 's32[2]{0}', space=sflag, size = 0x8, scoped, tag = 'scoped memory for tpu_custom_call.1']
    #allocation5 [shape = 'u8[8192]{0}', space=vmem, size = 0x2000, scoped, tag = 'input window, operand 1, single buffered']
    #allocation6 [shape = 's32[1]{0}', space=sflag, size = 0x4, scoped, tag = 'scoped memory for tpu_custom_call.1']
    #allocation7 [shape = 'u8[8192]{0}', space=vmem, size = 0x2000, scoped, tag = 'input window, operand 2, single buffered']
    #allocation8 [shape = 'u8[16384]{0}', space=vmem, size = 0x4000, scoped, tag = 'input window, operand 4, single buffered']
    #allocation9 [shape = 's32[1]{0}', space=sflag, size = 0x4, scoped, tag = 'scoped memory for tpu_custom_call.1']
    #allocation10 [shape = 'u8[16384]{0}', space=vmem, size = 0x4000, scoped, tag = 'output window, operand 0']
    %10 = vsyncpa [#allocation3], 0
    %s11 = scalar_lea.sflag [#allocation3], 1
    %12 = vsyncpa %s11, 0
    %13 = vsyncpa [#allocation6], 0
    %14 = vsyncpa [#allocation9], 0
    %15 = vsyncpa [#allocation4], 0
    %s16 = scalar_lea.sflag [#allocation4], 1
    %17 = vsyncpa %s16, 0
    loop: start=0, step=1, limit=4
    $region2: #{tpu_custom_call.1} parent=1 // loop_pre_header
      _
    $region3: #{tpu_custom_call.1} parent=1 // loop_header
      %s19 = sphi 0, %s23
      %p20 = scmp.ge.s32.totalorder %s19, 4
      %s29 = sphi 0, %s31
      %s32 = sphi 0, %s29
      %s33 = sphi 0, %s32
      %s49 = sphi 0, %s33
      %s53 = sphi 0, %s53
      %s55 = sphi 0, %s53
      %s56 = sphi 0, %s55
      %s70 = sphi 0, %s56
      %s74 = sphi 0, %s74
      %s76 = sphi 0, %s74
      %s77 = sphi 0, %s76
      %s91 = sphi 0, %s77
      %s95 = sphi 0, %s95
      %s97 = sphi 0, %s95
      %s98 = sphi 0, %s97
      %s112 = sphi 0, %s98
      %s116 = sphi 0, %s116
      %s118 = sphi 0, %s116
      %s119 = sphi 0, %s118
      %s133 = sphi 0, %s119
      %s139 = sphi 0, %s141
      %s142 = sphi 0, %s139
      %s143 = sphi 0, %s142
      %s159 = sphi 0, %s143
    $region4: #{tpu_custom_call.1} parent=1 // loop_header_branch
      %22 = sbr.rel (%p20) target = $region8
    $region5: #{tpu_custom_call.1} parent=1 // loop_body
      %s24 = ssub.s32 %s19, 1
      %s25 = ssub.s32 %s19, 2
      %s26 = sadd.s32 %s19, 1
      %s27 = ssub.s32 %s19, %s26
      %p28 = scmp.eq.s32.totalorder %s27, 0
      %s30 = sadd.s32 %s29, 1
      %s31 = scalar_select %p28, %s29, %s30
      %p34 = pneg %p28
      %p35 = scmp.eq.s32.totalorder %s19, 1
      %p36 = por %p34, %p35
      %p37 = scmp.ne.s32.totalorder %s29, %s32
      %p38 = scmp.eq.s32.totalorder %s19, 0
      %p39 = por %p37, %p38
      %p40 = scmp.ne.s32.totalorder %s29, %s32
      %p41 = scmp.eq.s32.totalorder %s24, 1
      %p42 = por %p40, %p41
      %p43 = scmp.ne.s32.totalorder %s32, %s33
      %p44 = scmp.eq.s32.totalorder %s24, 0
      %p45 = por %p43, %p44
      %p46 = scmp.ne.s32.totalorder %s32, %s33
      %p47 = scmp.eq.s32.totalorder %s25, 1
      %p48 = por %p46, %p47
      %p50 = scmp.ne.s32.totalorder %s33, %s49
      %p51 = scmp.eq.s32.totalorder %s25, 0
      %p52 = por %p50, %p51
      %s54 = sadd.s32 %s53, 1
      %p57 = scmp.eq.s32.totalorder %s19, 1
      %p58 = scmp.ne.s32.totalorder %s53, %s55
      %p59 = scmp.eq.s32.totalorder %s19, 0
      %p60 = por %p58, %p59
      %p61 = scmp.ne.s32.totalorder %s53, %s55
      %p62 = scmp.eq.s32.totalorder %s24, 1
      %p63 = por %p61, %p62
      %p64 = scmp.ne.s32.totalorder %s55, %s56
      %p65 = scmp.eq.s32.totalorder %s24, 0
      %p66 = por %p64, %p65
      %p67 = scmp.ne.s32.totalorder %s55, %s56
      %p68 = scmp.eq.s32.totalorder %s25, 1
      %p69 = por %p67, %p68
      %p71 = scmp.ne.s32.totalorder %s56, %s70
      %p72 = scmp.eq.s32.totalorder %s25, 0
      %p73 = por %p71, %p72
      %s75 = sadd.s32 %s74, 1
      %p78 = scmp.eq.s32.totalorder %s19, 1
      %p79 = scmp.ne.s32.totalorder %s74, %s76
      %p80 = scmp.eq.s32.totalorder %s19, 0
      %p81 = por %p79, %p80
      %p82 = scmp.ne.s32.totalorder %s74, %s76
      %p83 = scmp.eq.s32.totalorder %s24, 1
      %p84 = por %p82, %p83
      %p85 = scmp.ne.s32.totalorder %s76, %s77
      %p86 = scmp.eq.s32.totalorder %s24, 0
      %p87 = por %p85, %p86
      %p88 = scmp.ne.s32.totalorder %s76, %s77
      %p89 = scmp.eq.s32.totalorder %s25, 1
      %p90 = por %p88, %p89
      %p92 = scmp.ne.s32.totalorder %s77, %s91
      %p93 = scmp.eq.s32.totalorder %s25, 0
      %p94 = por %p92, %p93
      %s96 = sadd.s32 %s95, 1
      %p99 = scmp.eq.s32.totalorder %s19, 1
      %p100 = scmp.ne.s32.totalorder %s95, %s97
      %p101 = scmp.eq.s32.totalorder %s19, 0
      %p102 = por %p100, %p101
      %p103 = scmp.ne.s32.totalorder %s95, %s97
      %p104 = scmp.eq.s32.totalorder %s24, 1
      %p105 = por %p103, %p104
      %p106 = scmp.ne.s32.totalorder %s97, %s98
      %p107 = scmp.eq.s32.totalorder %s24, 0
      %p108 = por %p106, %p107
      %p109 = scmp.ne.s32.totalorder %s97, %s98
      %p110 = scmp.eq.s32.totalorder %s25, 1
      %p111 = por %p109, %p110
      %p113 = scmp.ne.s32.totalorder %s98, %s112
      %p114 = scmp.eq.s32.totalorder %s25, 0
      %p115 = por %p113, %p114
      %s117 = sadd.s32 %s116, 1
      %p120 = scmp.eq.s32.totalorder %s19, 1
      %p121 = scmp.ne.s32.totalorder %s116, %s118
      %p122 = scmp.eq.s32.totalorder %s19, 0
      %p123 = por %p121, %p122
      %p124 = scmp.ne.s32.totalorder %s116, %s118
      %p125 = scmp.eq.s32.totalorder %s24, 1
      %p126 = por %p124, %p125
      %p127 = scmp.ne.s32.totalorder %s118, %s119
      %p128 = scmp.eq.s32.totalorder %s24, 0
      %p129 = por %p127, %p128
      %p130 = scmp.ne.s32.totalorder %s118, %s119
      %p131 = scmp.eq.s32.totalorder %s25, 1
      %p132 = por %p130, %p131
      %p134 = scmp.ne.s32.totalorder %s119, %s133
      %p135 = scmp.eq.s32.totalorder %s25, 0
      %p136 = por %p134, %p135
      %s137 = ssub.s32 %s19, %s26
      %p138 = scmp.eq.s32.totalorder %s137, 0
      %s140 = sadd.s32 %s139, 1
      %s141 = scalar_select %p138, %s139, %s140
      %p144 = pneg %p138
      %p145 = scmp.eq.s32.totalorder %s19, 1
      %p146 = por %p144, %p145
      %p147 = scmp.ne.s32.totalorder %s139, %s142
      %p148 = scmp.eq.s32.totalorder %s19, 0
      %p149 = por %p147, %p148
      %p150 = scmp.ne.s32.totalorder %s139, %s142
      %p151 = scmp.eq.s32.totalorder %s24, 1
      %p152 = por %p150, %p151
      %p153 = scmp.ne.s32.totalorder %s142, %s143
      %p154 = scmp.eq.s32.totalorder %s24, 0
      %p155 = por %p153, %p154
      %p156 = scmp.ne.s32.totalorder %s142, %s143
      %p157 = scmp.eq.s32.totalorder %s25, 1
      %p158 = por %p156, %p157
      %p160 = scmp.ne.s32.totalorder %s143, %s159
      %p161 = scmp.eq.s32.totalorder %s25, 0
      %p162 = por %p160, %p161
      %p163 = scmp.le.s32.totalorder 1, %s19
      %p164 = scmp.lt.s32.totalorder %s19, 3
      %p165 = pnand %p163, %p164
      %p166 = pneg %p165
      // Predicated region
      $region9: #{tpu_custom_call.1} parent=5 // pred_check
        _
      $region10: #{tpu_custom_call.1} parent=5 // pred_check_branch
        %168 = sbr.rel (%p165) target = $region12
      $region11: #{tpu_custom_call.1} parent=5 // pred_region
        %s169 = ssub.s32 %s19, 1
        // Predicated region
        $region13: #{tpu_custom_call.1} parent=11 // pred_check
          %p170 = pneg %p66
        $region14: #{tpu_custom_call.1} parent=11 // pred_check_branch
          %172 = sbr.rel (%p170) target = $region16
        $region15: #{tpu_custom_call.1} parent=11 // pred_region
          %s174 = ssub.s32 256, 256
          %175 = vsyncadd [#allocation6], %s174
          %s176 = sshll.u32 [#allocation5], 4
          %s177 = int_to_ptr.vmem [resolvable:$true] %s176
          %182 = dma.hbm_to_vmem [thread:$0]  %s1, 256, %s177, [#allocation6], 64, 64, 4
        $region16: #{tpu_custom_call.1} parent=11 // pred_fallthru
          _
        // Predicated region
        $region17: #{tpu_custom_call.1} parent=11 // pred_check
          %p183 = pneg %p87
        $region18: #{tpu_custom_call.1} parent=11 // pred_check_branch
          %185 = sbr.rel (%p183) target = $region20
        $region19: #{tpu_custom_call.1} parent=11 // pred_region
          %s187 = ssub.s32 256, 256
          %188 = vsyncadd [#allocation6], %s187
          %s189 = sshll.u32 [#allocation7], 4
          %s190 = int_to_ptr.vmem [resolvable:$true] %s189
          %195 = dma.hbm_to_vmem [thread:$0]  %s2, 256, %s190, [#allocation6], 64, 64, 4
        $region20: #{tpu_custom_call.1} parent=11 // pred_fallthru
          _
        // Predicated region
        $region21: #{tpu_custom_call.1} parent=11 // pred_check
          %p196 = pneg %p108
        $region22: #{tpu_custom_call.1} parent=11 // pred_check_branch
          %198 = sbr.rel (%p196) target = $region24
        $region23: #{tpu_custom_call.1} parent=11 // pred_region
          _
        $region24: #{tpu_custom_call.1} parent=11 // pred_fallthru
          _
        // Predicated region
        $region25: #{tpu_custom_call.1} parent=11 // pred_check
          %p199 = pneg %p129
        $region26: #{tpu_custom_call.1} parent=11 // pred_check_branch
          %201 = sbr.rel (%p199) target = $region28
        $region27: #{tpu_custom_call.1} parent=11 // pred_region
          %s203 = ssub.s32 512, 512
          %204 = vsyncadd [#allocation9], %s203
          %s205 = sshll.u32 [#allocation8], 4
          %s206 = int_to_ptr.vmem [resolvable:$true] %s205
          %211 = dma.hbm_to_vmem [thread:$0]  %s4, 512, %s206, [#allocation9], 128, 128, 8
        $region28: #{tpu_custom_call.1} parent=11 // pred_fallthru
          _
      $region12: #{tpu_custom_call.1} parent=5 // pred_fallthru
        _
      %p212 = scmp.lt.s32.totalorder %s19, 2
      // Predicated region
      $region29: #{tpu_custom_call.1} parent=5 // pred_check
        %p213 = pneg %p212
      $region30: #{tpu_custom_call.1} parent=5 // pred_check_branch
        %215 = sbr.rel (%p213) target = $region32
      $region31: #{tpu_custom_call.1} parent=5 // pred_region
        // Predicated region
        $region33: #{tpu_custom_call.1} parent=31 // pred_check
          %p216 = pneg %p39
        $region34: #{tpu_custom_call.1} parent=31 // pred_check_branch
          %218 = sbr.rel (%p216) target = $region36
        $region35: #{tpu_custom_call.1} parent=31 // pred_region
          %s219 = sand.u32 %s29, 1
          %s220 = scalar_lea.sflag [#allocation3], %s219
          %s221 = sand.u32 %s29, 1
          %s222 = smul.addr %s221, 8
          %s223 = scalar_lea.vmem [#allocation2], %s222
          %s225 = ssub.s32 128, 128
          %226 = vsyncadd %s220, %s225
          %s227 = smul.addr %s19, 2
          %s228 = smul.addr %s227, 64
          %s229 = scalar_lea.hbm %s0, %s228
          %s230 = sshll.u32 %s223, 4
          %s231 = int_to_ptr.vmem [resolvable:$true] %s230
          %236 = dma.hbm_to_vmem [thread:$0]  %s229, 128, %s231, %s220, 64, 64, 4
        $region36: #{tpu_custom_call.1} parent=31 // pred_fallthru
          _
      $region32: #{tpu_custom_call.1} parent=5 // pred_fallthru
        _
      %p237 = scmp.le.s32.totalorder 1, %s19
      %p238 = scmp.lt.s32.totalorder %s19, 3
      %p239 = pnand %p237, %p238
      %p240 = pneg %p239
      // Predicated region
      $region37: #{tpu_custom_call.1} parent=5 // pred_check
        _
      $region38: #{tpu_custom_call.1} parent=5 // pred_check_branch
        %242 = sbr.rel (%p239) target = $region40
      $region39: #{tpu_custom_call.1} parent=5 // pred_region
        %s243 = ssub.s32 %s19, 1
        %s244 = sand.u32 %s32, 1
        %s245 = scalar_lea.sflag [#allocation3], %s244
        %s246 = sand.u32 %s32, 1
        %s247 = smul.addr %s246, 8
        %s248 = scalar_lea.vmem [#allocation2], %s247
        // Predicated region
        $region41: #{tpu_custom_call.1} parent=39 // pred_check
          %p249 = pneg %p45
        $region42: #{tpu_custom_call.1} parent=39 // pred_check_branch
          %251 = sbr.rel (%p249) target = $region44
        $region43: #{tpu_custom_call.1} parent=39 // pred_region
          %252 = dma.done %s245, 128
        $region44: #{tpu_custom_call.1} parent=39 // pred_fallthru
          _
        // Predicated region
        $region45: #{tpu_custom_call.1} parent=39 // pred_check
          %p253 = pneg %p66
        $region46: #{tpu_custom_call.1} parent=39 // pred_check_branch
          %255 = sbr.rel (%p253) target = $region48
        $region47: #{tpu_custom_call.1} parent=39 // pred_region
          %256 = dma.done [#allocation6], 256
        $region48: #{tpu_custom_call.1} parent=39 // pred_fallthru
          _
        // Predicated region
        $region49: #{tpu_custom_call.1} parent=39 // pred_check
          %p257 = pneg %p87
        $region50: #{tpu_custom_call.1} parent=39 // pred_check_branch
          %259 = sbr.rel (%p257) target = $region52
        $region51: #{tpu_custom_call.1} parent=39 // pred_region
          %260 = dma.done [#allocation6], 256
        $region52: #{tpu_custom_call.1} parent=39 // pred_fallthru
          _
        // Predicated region
        $region53: #{tpu_custom_call.1} parent=39 // pred_check
          %p261 = pneg %p129
        $region54: #{tpu_custom_call.1} parent=39 // pred_check_branch
          %263 = sbr.rel (%p261) target = $region56
        $region55: #{tpu_custom_call.1} parent=39 // pred_region
          %264 = dma.done [#allocation9], 512
        $region56: #{tpu_custom_call.1} parent=39 // pred_fallthru
          _
        %s265 = sand.u32 %s32, 1
        %s266 = scalar_lea.sflag [#allocation3], %s265
        %s267 = sand.u32 %s32, 1
        %s268 = smul.addr %s267, 8
        %s269 = scalar_lea.vmem [#allocation2], %s268
        %p270 = pneg %p45
        %p271 = pneg %p42
        %p272 = pneg %p66
        %p273 = pneg %p63
        %p274 = pneg %p87
        %p275 = pneg %p84
        %p276 = pneg %p108
        %p277 = pneg %p105
        %p278 = pneg %p129
        %p279 = pneg %p126
        %p280 = pneg %p155
        %p281 = pneg %p152
        %s282 = sand.u32 %s142, 1
        %s283 = scalar_lea.sflag [#allocation4], %s282
        %s284 = sand.u32 %s142, 1
        %s285 = smul.addr %s284, 16
        %s286 = scalar_lea.vmem [#allocation10], %s285
        %v288 = vld [vmem:[%s248] sm:$0xf]
        %v289 = vld [vmem:[%s248 + $0x4] sm:$0xf]
        %v290 = vld [vmem:[#allocation5] sm:$0xf]
        %v291 = vld [vmem:[#allocation5 + $0x4] sm:$0xf]
        %v292 = vld [vmem:[#allocation5 + $0x8] sm:$0xf]
        %v293 = vld [vmem:[#allocation5 + $0xc] sm:$0xf]
        %v296 = vunpack.c.l.b16 %v288
        %v297 = vunpack.c.l.b16 %v289
        %v298 = vpack.c.b16 %v297, %v296
        %v303 = vunpack.c.l.b16 %v290
        %v304 = vunpack.c.l.b16 %v291
        %v305 = vunpack.c.l.b16 %v292
        %v306 = vunpack.c.l.b16 %v293
        %v307 = vpack.c.b16 %v304, %v303
        %v308 = vpack.c.b16 %v306, %v305
        %vm311 = vcmask 261120
        %v313 = vsel %vm311, %v298, 0
        %315 = vmatprep.subr.bf16.mxu0 0
        %316 = vmatpush1.bf16.msra.mxu0 0
        %317 = vmatprep.subr.bf16.mxu0 0
        %318 = vmatpush1.bf16.msra.mxu0 0
        %319 = vmatprep.subr.bf16.mxu0 0
        %320 = vmatpush1.bf16.msra.mxu0 0
        %321 = vmatprep.subr.bf16.mxu0 0
        %322 = vmatpush1.bf16.msra.mxu0 0
        %323 = vmatprep.subr.bf16.mxu0 0
        %324 = vmatpush1.bf16.msra.mxu0 0
        %325 = vmatprep.subr.bf16.mxu0 0
        %326 = vmatpush1.bf16.msra.mxu0 0
        %327 = vmatprep.subr.bf16.mxu0 0
        %328 = vmatpush1.bf16.msra.mxu0 %v308
        %329 = vmatprep.subr.bf16.mxu0 0
        %330 = vmatpush1.bf16.msra.mxu0 %v307
        %331 = vmatprep.subr.bf16.mxu0 0
        %332 = vmatpush2.bf16.msra.mxu0 0
        %333 = vmatprep.subr.bf16.mxu0 0
        %334 = vmatpush2.bf16.msra.mxu0 0
        %335 = vmatprep.subr.bf16.mxu0 0
        %336 = vmatpush2.bf16.msra.mxu0 0
        %337 = vmatprep.subr.bf16.mxu0 0
        %338 = vmatpush2.bf16.msra.mxu0 0
        %339 = vmatprep.subr.bf16.mxu0 0
        %340 = vmatpush2.bf16.msra.mxu0 0
        %341 = vmatprep.subr.bf16.mxu0 0
        %342 = vmatpush2.bf16.msra.mxu0 0
        %343 = vmatprep.subr.bf16.mxu0 0
        %344 = vmatpush2.bf16.msra.mxu0 0
        %345 = vmatprep.subr.bf16.mxu0 0
        %346 = vmatpush2.bf16.msra.mxu0 0
        %347 = vmatprep.mubr.bf16.mxu0 0
        %348 = vmatmul.mubr.bf16.gmra.mxu0 %v313
        %v349 = vpop.f32.mrf.mxu0
        %v350 = vadd.f32 0.0, %v349
        %v351 = vpop.f32.mrf.mxu0
        %v352 = vpop.f32.mrf.mxu0
        %v353 = vadd.f32 0.0, %v352
        %v354 = vpop.f32.mrf.mxu0
        %355 = vdwg.mxu0
        %v356 = vmul.f32 %v350, %v350
        %v357 = vmul.f32 %v353, %v353
        %v358 = vsel %vm311, %v356, 0.0
        %v359 = vsel %vm311, %v357, 0.0
        %v360 = vadd.f32 %v358, %v359
        %v361 = vrot.slane %v360, 4
        %v362 = vadd.f32 %v360, %v361
        %v363 = vrot.slane %v362, 2
        %v364 = vadd.f32 %v362, %v363
        %v365 = vrot.slane %v364, 1
        %v366 = vadd.f32 %v364, %v365
        %v367 = vmax.f32 %v366, 1e-24
        %v368 = vrsqrt.pop %v367
        %vm369 = vcmask 523520
        %v370 = vsel %vm369, %v356, 0.0
        %v371 = vsel %vm369, %v357, 0.0
        %v372 = vadd.f32 %v370, %v371
        %v373 = vrot.slane %v372, 4
        %v374 = vadd.f32 %v372, %v373
        %v375 = vrot.slane %v374, 2
        %v376 = vadd.f32 %v374, %v375
        %v377 = vrot.slane %v376, 1
        %v378 = vadd.f32 %v376, %v377
        %v379 = vmax.f32 %v378, 1e-24
        %v380 = vrsqrt.pop %v379
        %v381 = vmul.f32 %v350, %v368
        %v382 = vmul.f32 %v353, %v368
        %v383 = vpack.c.bf16 %v382, %v381
        %v384 = vmul.f32 %v350, %v380
        %v385 = vmul.f32 %v353, %v380
        %v386 = vpack.c.bf16 %v385, %v384
        %387 = vxpose.xlu0.c.b16.start [1/8] %v383, 128
        %388 = vxpose.xlu0.c.b16.cont [2/8] 0, 128
        %389 = vxpose.xlu0.c.b16.cont [3/8] 0, 128
        %390 = vxpose.xlu0.c.b16.cont [4/8] 0, 128
        %391 = vxpose.xlu0.c.b16.cont [5/8] 0, 128
        %392 = vxpose.xlu0.c.b16.cont [6/8] 0, 128
        %393 = vxpose.xlu0.c.b16.cont [7/8] 0, 128
        %394 = vxpose.xlu0.c.b16.end [8/8] 0, 128
        %v395 = vpop.trf.xlu0
        %v396 = vpop.trf.xlu0
        %v397 = vpop.trf.xlu0
        %v398 = vpop.trf.xlu0
        %v399 = vpop.trf.xlu0
        %v400 = vpop.trf.xlu0
        %v401 = vpop.trf.xlu0
        %v402 = vpop.trf.xlu0
        %404 = vrot.lane.b32.xlu0 %v386, 96
        %v405 = vpop.permute.xlu0 %404
        %vm407 = vcmask 130048
        %v409 = vsel %vm407, %v395, 0
        %v412 = vsel %vm407, %v396, 0
        %414 = vmatprep.subr.bf16.mxu0 0
        %415 = vmatpush1.bf16.msra.mxu0 0
        %416 = vmatprep.subr.bf16.mxu0 0
        %417 = vmatpush1.bf16.msra.mxu0 0
        %418 = vmatprep.subr.bf16.mxu0 0
        %419 = vmatpush1.bf16.msra.mxu0 0
        %420 = vmatprep.subr.bf16.mxu0 0
        %421 = vmatpush1.bf16.msra.mxu0 0
        %422 = vmatprep.subr.bf16.mxu0 0
        %423 = vmatpush1.bf16.msra.mxu0 0
        %424 = vmatprep.subr.bf16.mxu0 0
        %425 = vmatpush1.bf16.msra.mxu0 0
        %426 = vmatprep.subr.bf16.mxu0 0
        %427 = vmatpush1.bf16.msra.mxu0 0
        %428 = vmatprep.subr.bf16.mxu0 0
        %429 = vmatpush1.bf16.msra.mxu0 %v405
        %430 = vmatprep.subr.bf16.mxu0 0
        %431 = vmatpush2.bf16.msra.mxu0 0
        %432 = vmatprep.subr.bf16.mxu0 0
        %433 = vmatpush2.bf16.msra.mxu0 0
        %434 = vmatprep.subr.bf16.mxu0 0
        %435 = vmatpush2.bf16.msra.mxu0 0
        %436 = vmatprep.subr.bf16.mxu0 0
        %437 = vmatpush2.bf16.msra.mxu0 0
        %438 = vmatprep.subr.bf16.mxu0 0
        %439 = vmatpush2.bf16.msra.mxu0 0
        %440 = vmatprep.subr.bf16.mxu0 0
        %441 = vmatpush2.bf16.msra.mxu0 0
        %442 = vmatprep.subr.bf16.mxu0 0
        %443 = vmatpush2.bf16.msra.mxu0 0
        %444 = vmatprep.subr.bf16.mxu0 0
        %445 = vmatpush2.bf16.msra.mxu0 0
        %446 = vmatprep.mubr.bf16.mxu0 0
        %447 = vmatmul.mubr.bf16.gmra.mxu0 %v409
        %v448 = vpop.f32.mrf.mxu0
        %v449 = vadd.f32 0.0, %v448
        %v450 = vpop.f32.mrf.mxu0
        %v451 = vpop.f32.mrf.mxu0
        %v452 = vadd.f32 0.0, %v451
        %v453 = vpop.f32.mrf.mxu0
        %454 = vmatprep.mubr.bf16.mxu0 0
        %455 = vmatmul.mubr.bf16.gmra.mxu0 %v412
        %v456 = vpop.f32.mrf.mxu0
        %v457 = vadd.f32 0.0, %v456
        %v458 = vpop.f32.mrf.mxu0
        %v459 = vpop.f32.mrf.mxu0
        %v460 = vadd.f32 0.0, %v459
        %v461 = vpop.f32.mrf.mxu0
        %462 = vdwg.mxu0
        %v463 = vmul.f32 %v449, 1.442695
        %v464 = vpow.pop %v463
        %v465 = vmul.f32 %v452, 1.442695
        %v466 = vpow.pop %v465
        %v467 = vmul.f32 %v457, 1.442695
        %v468 = vpow.pop %v467
        %v469 = vmul.f32 %v460, 1.442695
        %v470 = vpow.pop %v469
        %v471 = vld [vmem:[#allocation8] sm:$0xff]
        %v472 = vld [vmem:[#allocation8 + $0x8] sm:$0xff]
        %v473 = vld [vmem:[#allocation8 + $0x10] sm:$0xff]
        %v474 = vld [vmem:[#allocation8 + $0x18] sm:$0xff]
        %v475 = vmul.f32 %v464, %v471
        %v476 = vmul.f32 %v466, %v472
        %v477 = vmul.f32 %v468, %v473
        %v478 = vmul.f32 %v470, %v474
        %v479 = vsel %vm311, %v475, 0.0
        %480 = vadd.xlane.f32.xlu0 %v479
        %v481 = vpop.xlane.xlu0 %480
        %v482 = vsel %vm311, %v476, 0.0
        %483 = vadd.xlane.f32.xlu0 %v482
        %v484 = vpop.xlane.xlu0 %483
        %v485 = vsel %vm311, %v477, 0.0
        %486 = vadd.xlane.f32.xlu0 %v485
        %v487 = vpop.xlane.xlu0 %486
        %v488 = vsel %vm311, %v478, 0.0
        %489 = vadd.xlane.f32.xlu0 %v488
        %v490 = vpop.xlane.xlu0 %489
        %v491 = vrcp.pop %v481
        %v492 = vrcp.pop %v484
        %v493 = vrcp.pop %v487
        %v494 = vrcp.pop %v490
        %v495 = vmul.f32 %v475, %v491
        %v496 = vmul.f32 %v476, %v492
        %v497 = vmul.f32 %v477, %v493
        %v498 = vmul.f32 %v478, %v494
        %v499 = vpack.c.bf16 %v496, %v495
        %v500 = vpack.c.bf16 %v498, %v497
        %v501 = vpack.c.bf16 %v353, %v350
        %503 = vrot.lane.b32.xlu0 %v501, 64
        %v504 = vpop.permute.xlu0 %503
        %v506 = vsel %vm311, %v504, 0
        %v509 = vsel %vm311, %v499, 0
        %v512 = vsel %vm311, %v500, 0
        %514 = vmatprep.subr.bf16.mxu0 0
        %515 = vmatpush1.bf16.xpose.msra.mxu0 0
        %516 = vmatprep.subr.bf16.mxu0 0
        %517 = vmatpush1.bf16.xpose.msra.mxu0 0
        %518 = vmatprep.subr.bf16.mxu0 0
        %519 = vmatpush1.bf16.xpose.msra.mxu0 0
        %520 = vmatprep.subr.bf16.mxu0 0
        %521 = vmatpush1.bf16.xpose.msra.mxu0 0
        %522 = vmatprep.subr.bf16.mxu0 0
        %523 = vmatpush1.bf16.xpose.msra.mxu0 0
        %524 = vmatprep.subr.bf16.mxu0 0
        %525 = vmatpush1.bf16.xpose.msra.mxu0 0
        %526 = vmatprep.subr.bf16.mxu0 0
        %527 = vmatpush1.bf16.xpose.msra.mxu0 %v512
        %528 = vmatprep.subr.bf16.mxu0 0
        %529 = vmatpush1.bf16.xpose.msra.mxu0 %v509
        %530 = vmatprep.subr.bf16.mxu0 0
        %531 = vmatpush2.bf16.xpose.msra.mxu0 0
        %532 = vmatprep.subr.bf16.mxu0 0
        %533 = vmatpush2.bf16.xpose.msra.mxu0 0
        %534 = vmatprep.subr.bf16.mxu0 0
        %535 = vmatpush2.bf16.xpose.msra.mxu0 0
        %536 = vmatprep.subr.bf16.mxu0 0
        %537 = vmatpush2.bf16.xpose.msra.mxu0 0
        %538 = vmatprep.subr.bf16.mxu0 0
        %539 = vmatpush2.bf16.xpose.msra.mxu0 0
        %540 = vmatprep.subr.bf16.mxu0 0
        %541 = vmatpush2.bf16.xpose.msra.mxu0 0
        %542 = vmatprep.subr.bf16.mxu0 0
        %543 = vmatpush2.bf16.xpose.msra.mxu0 0
        %544 = vmatprep.subr.bf16.mxu0 0
        %545 = vmatpush2.bf16.xpose.msra.mxu0 0
        %546 = vmatprep.mubr.bf16.mxu0 0
        %547 = vmatmul.mubr.bf16.gmra.mxu0 %v506
        %v548 = vpop.f32.mrf.mxu0
        %v549 = vadd.f32 0.0, %v548
        %v550 = vpop.f32.mrf.mxu0
        %v551 = vpop.f32.mrf.mxu0
        %v552 = vadd.f32 0.0, %v551
        %v553 = vpop.f32.mrf.mxu0
        %554 = vdwg.mxu0
        %v555 = vpack.c.bf16 %v552, %v549
        %v556 = vld [vmem:[#allocation7] sm:$0xf]
        %v557 = vld [vmem:[#allocation7 + $0x4] sm:$0xf]
        %v558 = vld [vmem:[#allocation7 + $0x8] sm:$0xf]
        %v559 = vld [vmem:[#allocation7 + $0xc] sm:$0xf]
        %v560 = vld [vmem:[%s3] sm:$0x1]
        %v562 = vlaneseq
        %v563 = vshrl.u32 %v562, 7
        %v564 = vsub.s32 0, %v563
        %v565 = vrot.slane %v560, %v564
        %v571 = vunpack.c.l.b16 %v556
        %v572 = vunpack.c.l.b16 %v557
        %v573 = vunpack.c.l.b16 %v558
        %v574 = vunpack.c.l.b16 %v559
        %v575 = vpack.c.b16 %v572, %v571
        %v576 = vpack.c.b16 %v574, %v573
        %v580 = vsel %vm311, %v555, 0
        %582 = vmatprep.subr.bf16.mxu0 0
        %583 = vmatpush1.bf16.msra.mxu0 0
        %584 = vmatprep.subr.bf16.mxu0 0
        %585 = vmatpush1.bf16.msra.mxu0 0
        %586 = vmatprep.subr.bf16.mxu0 0
        %587 = vmatpush1.bf16.msra.mxu0 0
        %588 = vmatprep.subr.bf16.mxu0 0
        %589 = vmatpush1.bf16.msra.mxu0 0
        %590 = vmatprep.subr.bf16.mxu0 0
        %591 = vmatpush1.bf16.msra.mxu0 0
        %592 = vmatprep.subr.bf16.mxu0 0
        %593 = vmatpush1.bf16.msra.mxu0 0
        %594 = vmatprep.subr.bf16.mxu0 0
        %595 = vmatpush1.bf16.msra.mxu0 %v576
        %596 = vmatprep.subr.bf16.mxu0 0
        %597 = vmatpush1.bf16.msra.mxu0 %v575
        %598 = vmatprep.subr.bf16.mxu0 0
        %599 = vmatpush2.bf16.msra.mxu0 0
        %600 = vmatprep.subr.bf16.mxu0 0
        %601 = vmatpush2.bf16.msra.mxu0 0
        %602 = vmatprep.subr.bf16.mxu0 0
        %603 = vmatpush2.bf16.msra.mxu0 0
        %604 = vmatprep.subr.bf16.mxu0 0
        %605 = vmatpush2.bf16.msra.mxu0 0
        %606 = vmatprep.subr.bf16.mxu0 0
        %607 = vmatpush2.bf16.msra.mxu0 0
        %608 = vmatprep.subr.bf16.mxu0 0
        %609 = vmatpush2.bf16.msra.mxu0 0
        %610 = vmatprep.subr.bf16.mxu0 0
        %611 = vmatpush2.bf16.msra.mxu0 0
        %612 = vmatprep.subr.bf16.mxu0 0
        %613 = vmatpush2.bf16.msra.mxu0 0
        %614 = vmatprep.mubr.bf16.mxu0 0
        %615 = vmatmul.mubr.bf16.gmra.mxu0 %v580
        %v616 = vpop.f32.mrf.mxu0
        %v617 = vadd.f32 %v565, %v616
        %v618 = vpop.f32.mrf.mxu0
        %v619 = vpop.f32.mrf.mxu0
        %v620 = vadd.f32 %v565, %v619
        %v621 = vpop.f32.mrf.mxu0
        %622 = vdwg.mxu0
        %623 = vst.msk [vmem:[%s286] sm:$0xff] %vm311, %v617
        %624 = vst.msk [vmem:[%s286 + $0x8] sm:$0xff] %vm311, %v620
        %s625 = sand.u32 %s142, 1
        %s626 = scalar_lea.sflag [#allocation4], %s625
        %s627 = sand.u32 %s142, 1
        %s628 = smul.addr %s627, 16
        %s629 = scalar_lea.vmem [#allocation10], %s628
        // Predicated region
        $region57: #{tpu_custom_call.1} parent=39 // pred_check
          %p630 = pneg %p152
        $region58: #{tpu_custom_call.1} parent=39 // pred_check_branch
          %632 = sbr.rel (%p630) target = $region60
        $region59: #{tpu_custom_call.1} parent=39 // pred_region
          %s634 = ssub.s32 256, 256
          %635 = vsyncadd %s626, %s634
          %s636 = smul.addr %s24, 2
          %s637 = smul.addr %s636, 128
          %s638 = scalar_lea.hbm %s5, %s637
          %s639 = sshll.u32 %s629, 4
          %s640 = int_to_ptr.vmem [resolvable:$true] %s639
          %645 = dma.vmem_to_hbm [thread:$0]  %s640, 256, %s638, %s626, 128, 128, 8
        $region60: #{tpu_custom_call.1} parent=39 // pred_fallthru
          _
      $region40: #{tpu_custom_call.1} parent=5 // pred_fallthru
        _
      %p646 = scmp.le.s32.totalorder 2, %s19
      // Predicated region
      $region61: #{tpu_custom_call.1} parent=5 // pred_check
        %p647 = pneg %p646
      $region62: #{tpu_custom_call.1} parent=5 // pred_check_branch
        %649 = sbr.rel (%p647) target = $region64
      $region63: #{tpu_custom_call.1} parent=5 // pred_region
        %s650 = ssub.s32 %s19, 2
        // Predicated region
        $region65: #{tpu_custom_call.1} parent=63 // pred_check
          %p651 = pneg %p158
        $region66: #{tpu_custom_call.1} parent=63 // pred_check_branch
          %653 = sbr.rel (%p651) target = $region68
        $region67: #{tpu_custom_call.1} parent=63 // pred_region
          %s654 = sand.u32 %s143, 1
          %s655 = scalar_lea.sflag [#allocation4], %s654
          %s656 = sand.u32 %s143, 1
          %s657 = smul.addr %s656, 16
          %s658 = scalar_lea.vmem [#allocation10], %s657
          %659 = dma.done %s655, 256
        $region68: #{tpu_custom_call.1} parent=63 // pred_fallthru
          _
      $region64: #{tpu_custom_call.1} parent=5 // pred_fallthru
        _
    $region6: #{tpu_custom_call.1} parent=1 // loop_footer
      %s23 = sadd.s32 1, %s19
    $region7: #{tpu_custom_call.1} parent=1 // loop_footer_branch
      %18 = sbr.rel target = $region3
    $region8: #{tpu_custom_call.1} parent=1 // loop_exit
      _
    %660 = vsyncpa [#allocation3], 1
    %s661 = scalar_lea.sflag [#allocation3], 1
    %662 = vsyncpa %s661, 1
    %663 = vsyncpa [#allocation6], 1
    %664 = vsyncpa [#allocation9], 1
    %665 = vsyncpa [#allocation4], 1
    %s666 = scalar_lea.sflag [#allocation4], 1
    %667 = vsyncpa %s666, 1

</llo_original>
